<compile_context>
chip_gen: v7x
topology: tpu7x:2x2x1
jax: 0.10.0
libtpu: 0.0.40
codegen_flags: <defaults>
</compile_context>

<pallas_src>
import functools

import jax
import jax.numpy as jnp
from jax.experimental import pallas as pl
from jax.experimental.pallas import tpu as pltpu

BN_EPS = 1e-5


def _spatial_att_kernel(x_ref, wg_ref, wb_ref, o_ref):
    """One P-tile of shape (n = b*c, tile_p); BN statistics reduce over axis 0.

    wg_ref = w_bn * gamma   (1, tile_p)
    wb_ref = w_bn * beta    (1, tile_p)
    """
    xf = x_ref[...].astype(jnp.float32)
    n = xf.shape[0]
    inv_n = jnp.float32(1.0 / n)

    # Single-pass training-mode BatchNorm stats (biased variance) per spatial position p.
    s1 = jnp.sum(xf, axis=0, keepdims=True)
    s2 = jnp.sum(xf * xf, axis=0, keepdims=True)
    mu = s1 * inv_n
    var = jnp.maximum(s2 * inv_n - mu * mu, jnp.float32(0.0))  # clamp: E[x^2]-mu^2 >= 0
    inv_std = jax.lax.rsqrt(var + jnp.float32(BN_EPS))

    # z = w_bn*bn = (w_bn*gamma*inv_std)*x + (w_bn*beta - mu*(w_bn*gamma*inv_std))
    a = wg_ref[...].astype(jnp.float32) * inv_std          # (1, tile_p)
    bias = wb_ref[...].astype(jnp.float32) - mu * a        # (1, tile_p)
    z = xf * a + bias                                      # one FMA per element

    # NOTE: jax.nn.sigmoid lowers to the EUP logistic path; if a bundle dump ever shows a
    # VPU divide co-binding (v7x bf16), switch to pl.reciprocal(1+jnp.exp(-z), approx=True).
    o_ref[...] = (jax.nn.sigmoid(z) * xf).astype(o_ref.dtype)


def _vmem_limit_bytes():
    """Scoped VMEM limit sized from the chip: 64 MiB on 128 MiB chips, 32 MiB on v7x."""
    try:
        phys = int(pltpu.get_tpu_info().vmem_capacity_bytes)
    except Exception:
        phys = 64 * 1024 * 1024
    return min(phys // 2, 64 * 1024 * 1024)


def _choose_tile_p(p, n, in_bytes, vmem_limit):
    """Lane tile along P. Largest 128-multiple whose live footprint fits ~60% of the VMEM
    limit, capped so the grid keeps >= 4 steps (2 per TC on v7x) when p allows, else >= 2."""
    if p <= 128:
        return p  # single full-extent block (allowed by the (8,128) rule)

    budget = int(vmem_limit * 0.6)
    # Per p-column live bytes: in+out blocks double-buffered (2 each, input dtype) plus
    # ~two full-size f32 temporaries inside the kernel body.
    per_col = n * (4 * in_bytes + 8)
    fit = max(128, (budget // per_col) // 128 * 128)
    # TODO(synk): if b*c is so large that even a 128-wide strip exceeds the budget, split the
    # reduction across an "arbitrary" n grid axis with sum/sum^2 VMEM accumulators + a second
    # apply sweep instead of relying on the raised vmem limit alone.
    p_aligned = max(128, (p // 128) * 128)   # tail (if any) handled by cdiv-grid padding
    tile = min(fit, p_aligned)

    # Prefer >= 4 grid steps (pipelining on each of v7x's 2 TCs), fall back to >= 2.
    for min_steps in (4, 2):
        capped = tile
        while capped > 128 and pl.cdiv(p, capped) < min_steps:
            capped -= 128
        if pl.cdiv(p, capped) >= min_steps:
            return capped
    return 128


@jax.jit
def spatial_att(x, gamma, beta):
    """x: (b, c, h, w); gamma, beta: (h*w,) BN affine params (module requires h*w == c)."""
    b, c, h, w = x.shape
    p = h * w
    n = b * c
    assert gamma.shape == (p,) and beta.shape == (p,), "Spatial_Att requires h*w == channels"

    # gamma/beta-only work hoisted out of the per-tile body (P elements, done once).
    g32 = gamma.astype(jnp.float32)
    abs_g = jnp.abs(g32)
    w_bn = abs_g / jnp.sum(abs_g)
    wg = (w_bn * g32).reshape(1, p)                         # w_bn * gamma
    wb = (w_bn * beta.astype(jnp.float32)).reshape(1, p)    # w_bn * beta

    in_bytes = jnp.dtype(x.dtype).itemsize
    vmem_limit = _vmem_limit_bytes()
    tile_p = _choose_tile_p(p, n, in_bytes, vmem_limit)
    grid = (pl.cdiv(p, tile_p),)

    x2d = x.reshape(n, p)   # free reshape of contiguous NCHW; lanes = P (lane-dense tiles)
    out2d = pl.pallas_call(
        _spatial_att_kernel,
        out_shape=jax.ShapeDtypeStruct((n, p), x.dtype),
        grid_spec=pltpu.PrefetchScalarGridSpec(
            num_scalar_prefetch=0,
            grid=grid,
            in_specs=[
                pl.BlockSpec((n, tile_p), lambda j: (0, j)),
                pl.BlockSpec((1, tile_p), lambda j: (0, j)),
                pl.BlockSpec((1, tile_p), lambda j: (0, j)),
            ],
            out_specs=pl.BlockSpec((n, tile_p), lambda j: (0, j)),
        ),
        compiler_params=pltpu.CompilerParams(
            dimension_semantics=("parallel",),   # P-tiles are independent
            vmem_limit_bytes=vmem_limit,
        ),
    )(x2d, wg, wb)
    return out2d.reshape(b, c, h, w)


def spatial_att_reference(x, gamma, beta):
    """Pure-JAX reference mirroring the PyTorch forward, for validation."""
    b, c, h, w = x.shape
    p = h * w
    y = jnp.transpose(x, (0, 2, 3, 1)).reshape(b, p, 1, c)         # (b, P, 1, c)
    mu = jnp.mean(y, axis=(0, 2, 3), keepdims=True)
    var = jnp.mean((y - mu) ** 2, axis=(0, 2, 3), keepdims=True)
    bn = gamma.reshape(1, p, 1, 1) * (y - mu) / jnp.sqrt(var + BN_EPS) \
        + beta.reshape(1, p, 1, 1)
    w_bn = jnp.abs(gamma) / jnp.sum(jnp.abs(gamma))                # (P,)
    z = jnp.transpose(bn, (0, 3, 2, 1))                            # (b, c, 1, P)
    z = (w_bn * z).reshape(b, c, h, w)
    return jax.nn.sigmoid(z) * x


def _run_case(key, b, c, h, w):
    kx, kg, kb = jax.random.split(key, 3)
    x = jax.random.normal(kx, (b, c, h, w), dtype=jnp.float32)
    gamma = 0.5 + 0.1 * jax.random.normal(kg, (h * w,), dtype=jnp.float32)
    beta = 0.1 * jax.random.normal(kb, (h * w,), dtype=jnp.float32)

    out = jax.block_until_ready(spatial_att(x, gamma, beta))
    ref = spatial_att_reference(x, gamma, beta)
    assert out.shape == x.shape and out.dtype == x.dtype
    assert jnp.allclose(out, ref, atol=1e-4, rtol=1e-4), \
        f"mismatch vs reference for shape {(b, c, h, w)}"


if __name__ == "__main__":
    # Module constraint: h*w must equal `channels` (nn.BatchNorm2d(channels) is fed h*w).
    key = jax.random.PRNGKey(0)
    k1, k2, k3 = jax.random.split(key, 3)
    _run_case(k1, 2, 256, 16, 16)  # tiled lane-dense path: p=256 -> 2 grid steps of 128 lanes
    _run_case(k2, 8, 64, 8, 8)     # small-P: single full-extent block, no host transpose
    _run_case(k3, 2, 16, 4, 4)     # tiny: single full-extent block
    print("KERNEL_OK")
</pallas_src>

<mosaic_0001>
module attributes {stable_mosaic.version = 11 : i64} {
  func.func @_spatial_att_kernel(%arg0: i32, %arg1: memref<512x128xf32, #tpu.memory_space<vmem>>, %arg2: memref<1x128xf32, #tpu.memory_space<vmem>>, %arg3: memref<1x128xf32, #tpu.memory_space<vmem>>, %arg4: memref<512x128xf32, #tpu.memory_space<vmem>>) attributes {dimension_semantics = [#tpu.dimension_semantics<parallel>], iteration_bounds = array<i64: 2>, scalar_prefetch = 0 : i64, scratch_operands = 0 : i64, tpu.core_type = #tpu.core_type<tc>, window_params = [{transform_indices = @transform_0, window_bounds = array<i64: 512, 128>}, {transform_indices = @transform_1, window_bounds = array<i64: 1, 128>}, {transform_indices = @transform_2, window_bounds = array<i64: 1, 128>}, {transform_indices = @transform_3, window_bounds = array<i64: 512, 128>}]} {
    %c0 = arith.constant 0 : index
    %c0_0 = arith.constant 0 : index
    %0 = vector.load %arg1[%c0, %c0_0] : memref<512x128xf32, #tpu.memory_space<vmem>>, vector<512x128xf32>
    %cst = arith.constant dense<0.000000e+00> : vector<128xf32>
    %1 = vector.multi_reduction <add>, %0, %cst [0] : vector<512x128xf32> to vector<128xf32>
    %2 = vector.shape_cast %1 : vector<128xf32> to vector<1x128xf32>
    %3 = arith.mulf %0, %0 : vector<512x128xf32>
    %cst_1 = arith.constant dense<0.000000e+00> : vector<128xf32>
    %4 = vector.multi_reduction <add>, %3, %cst_1 [0] : vector<512x128xf32> to vector<128xf32>
    %5 = vector.shape_cast %4 : vector<128xf32> to vector<1x128xf32>
    %cst_2 = arith.constant 0.001953125 : f32
    %6 = vector.broadcast %cst_2 : f32 to vector<1x128xf32>
    %7 = arith.mulf %2, %6 : vector<1x128xf32>
    %cst_3 = arith.constant 0.001953125 : f32
    %8 = vector.broadcast %cst_3 : f32 to vector<1x128xf32>
    %9 = arith.mulf %5, %8 : vector<1x128xf32>
    %10 = arith.mulf %7, %7 : vector<1x128xf32>
    %11 = arith.subf %9, %10 : vector<1x128xf32>
    %cst_4 = arith.constant 0.000000e+00 : f32
    %12 = vector.broadcast %cst_4 : f32 to vector<1x128xf32>
    %13 = arith.maximumf %11, %12 : vector<1x128xf32>
    %cst_5 = arith.constant 9.99999974E-6 : f32
    %14 = vector.broadcast %cst_5 : f32 to vector<1x128xf32>
    %15 = arith.addf %13, %14 : vector<1x128xf32>
    %16 = math.rsqrt %15 : vector<1x128xf32>
    %c0_6 = arith.constant 0 : index
    %c0_7 = arith.constant 0 : index
    %17 = vector.load %arg2[%c0_6, %c0_7] : memref<1x128xf32, #tpu.memory_space<vmem>>, vector<1x128xf32>
    %18 = arith.mulf %17, %16 : vector<1x128xf32>
    %c0_8 = arith.constant 0 : index
    %c0_9 = arith.constant 0 : index
    %19 = vector.load %arg3[%c0_8, %c0_9] : memref<1x128xf32, #tpu.memory_space<vmem>>, vector<1x128xf32>
    %20 = arith.mulf %7, %18 : vector<1x128xf32>
    %21 = arith.subf %19, %20 : vector<1x128xf32>
    %22 = vector.broadcast %18 : vector<1x128xf32> to vector<512x128xf32>
    %23 = arith.mulf %0, %22 : vector<512x128xf32>
    %24 = vector.broadcast %21 : vector<1x128xf32> to vector<512x128xf32>
    %25 = arith.addf %23, %24 : vector<512x128xf32>
    %26 = arith.negf %25 : vector<512x128xf32>
    %27 = math.exp %26 : vector<512x128xf32>
    %cst_10 = arith.constant 1.000000e+00 : f32
    %28 = vector.broadcast %cst_10 : f32 to vector<512x128xf32>
    %29 = arith.addf %28, %27 : vector<512x128xf32>
    %30 = arith.divf %28, %29 : vector<512x128xf32>
    %31 = arith.mulf %30, %0 : vector<512x128xf32>
    %c0_11 = arith.constant 0 : index
    %c0_12 = arith.constant 0 : index
    %32 = vector.load %arg4[%c0_11, %c0_12] : memref<512x128xf32, #tpu.memory_space<vmem>>, vector<512x128xf32>
    tpu.vector_store %arg4[%c0_11, %c0_12], %31 {strides = array<i32>} : memref<512x128xf32, #tpu.memory_space<vmem>>, vector<512x128xf32>,
    return
  }
  func.func @transform_0(%arg0: i32) -> (i32, i32) {
    %c0_i32 = arith.constant 0 : i32
    %c0_i32_0 = arith.constant 0 : i32
    return %c0_i32, %arg0 : i32, i32
  }
  func.func @transform_1(%arg0: i32) -> (i32, i32) {
    %c0_i32 = arith.constant 0 : i32
    %c0_i32_0 = arith.constant 0 : i32
    return %c0_i32, %arg0 : i32, i32
  }
  func.func @transform_2(%arg0: i32) -> (i32, i32) {
    %c0_i32 = arith.constant 0 : i32
    %c0_i32_0 = arith.constant 0 : i32
    return %c0_i32, %arg0 : i32, i32
  }
  func.func @transform_3(%arg0: i32) -> (i32, i32) {
    %c0_i32 = arith.constant 0 : i32
    %c0_i32_0 = arith.constant 0 : i32
    return %c0_i32, %arg0 : i32, i32
  }
}

</mosaic_0001>

<llo_original>
// kernel: spatial_att.1
$region0: #{spatial_att.1}
  #allocation0 [shape = 'u32[]', space=smem, size = 0x4, offset = 0x4, fixed_abs, tag = 'smem constant byte address 0x4 - core index']
  #allocation1 [shape = 'u32[144,128]{1,0:T(1,128)}', space=vmem, size = 0x12000, scoped, tag = 'internal scratch']
  %s0 = inlined_call_operand.vmem [shape: f32[512,256], index: 0, kind: input, shape index: {}]
  %s1 = inlined_call_operand.vmem [shape: f32[1,256], index: 1, kind: input, shape index: {}]
  %s2 = inlined_call_operand.vmem [shape: f32[1,256], index: 2, kind: input, shape index: {}]
  %s3 = inlined_call_operand.vmem [shape: f32[512,256], index: 3, kind: output, shape index: {}]
  %s4 = sld [smem:[#allocation0]]
  $region117: #{spatial_att.1} parent=0
    _
  %s6 = ssub.s32 1, %s4
  %s7 = scalar_select 0, %s6, %s4
  $region1: #{spatial_att.1} parent=0
    #allocation2 [shape = 'u8[524288]{0}', space=vmem, size = 0x80000, scoped, tag = 'input window, operand 0']
    #allocation3 [shape = 'u8[524288]{0}', space=vmem, size = 0x80000, scoped, tag = 'output window, operand 0']
    loop: start=0, step=1, limit=4
    $region2: #{spatial_att.1} parent=1 // loop_pre_header
      _
    $region3: #{spatial_att.1} parent=1 // loop_header
      %s9 = sphi 0, %s13
      %p10 = scmp.ge.s32.totalorder %s9, 4
      %s19 = sphi 0, %s21
      %s22 = sphi 0, %s19
      %s23 = sphi 0, %s22
      %s39 = sphi 0, %s23
      %s45 = sphi 0, %s47
      %s48 = sphi 0, %s45
      %s49 = sphi 0, %s48
      %s65 = sphi 0, %s49
      %s71 = sphi 0, %s73
      %s74 = sphi 0, %s71
      %s75 = sphi 0, %s74
      %s91 = sphi 0, %s75
      %s97 = sphi 0, %s99
      %s100 = sphi 0, %s97
      %s101 = sphi 0, %s100
      %s117 = sphi 0, %s101
    $region4: #{spatial_att.1} parent=1 // loop_header_branch
      %12 = sbr.rel (%p10) target = $region8
    $region5: #{spatial_att.1} parent=1 // loop_body
      %s14 = ssub.s32 %s9, 1
      %s15 = ssub.s32 %s9, 2
      %s16 = sadd.s32 %s9, 1
      %s17 = ssub.s32 %s9, %s16
      %p18 = scmp.eq.s32.totalorder %s17, 0
      %s20 = sadd.s32 %s19, 1
      %s21 = scalar_select %p18, %s19, %s20
      %p24 = pneg %p18
      %p25 = scmp.eq.s32.totalorder %s9, 1
      %p26 = por %p24, %p25
      %p27 = scmp.ne.s32.totalorder %s19, %s22
      %p28 = scmp.eq.s32.totalorder %s9, 0
      %p29 = por %p27, %p28
      %p30 = scmp.ne.s32.totalorder %s19, %s22
      %p31 = scmp.eq.s32.totalorder %s14, 1
      %p32 = por %p30, %p31
      %p33 = scmp.ne.s32.totalorder %s22, %s23
      %p34 = scmp.eq.s32.totalorder %s14, 0
      %p35 = por %p33, %p34
      %p36 = scmp.ne.s32.totalorder %s22, %s23
      %p37 = scmp.eq.s32.totalorder %s15, 1
      %p38 = por %p36, %p37
      %p40 = scmp.ne.s32.totalorder %s23, %s39
      %p41 = scmp.eq.s32.totalorder %s15, 0
      %p42 = por %p40, %p41
      %s43 = ssub.s32 %s9, %s16
      %p44 = scmp.eq.s32.totalorder %s43, 0
      %s46 = sadd.s32 %s45, 1
      %s47 = scalar_select %p44, %s45, %s46
      %p50 = pneg %p44
      %p51 = scmp.eq.s32.totalorder %s9, 1
      %p52 = por %p50, %p51
      %p53 = scmp.ne.s32.totalorder %s45, %s48
      %p54 = scmp.eq.s32.totalorder %s9, 0
      %p55 = por %p53, %p54
      %p56 = scmp.ne.s32.totalorder %s45, %s48
      %p57 = scmp.eq.s32.totalorder %s14, 1
      %p58 = por %p56, %p57
      %p59 = scmp.ne.s32.totalorder %s48, %s49
      %p60 = scmp.eq.s32.totalorder %s14, 0
      %p61 = por %p59, %p60
      %p62 = scmp.ne.s32.totalorder %s48, %s49
      %p63 = scmp.eq.s32.totalorder %s15, 1
      %p64 = por %p62, %p63
      %p66 = scmp.ne.s32.totalorder %s49, %s65
      %p67 = scmp.eq.s32.totalorder %s15, 0
      %p68 = por %p66, %p67
      %s69 = ssub.s32 %s9, %s16
      %p70 = scmp.eq.s32.totalorder %s69, 0
      %s72 = sadd.s32 %s71, 1
      %s73 = scalar_select %p70, %s71, %s72
      %p76 = pneg %p70
      %p77 = scmp.eq.s32.totalorder %s9, 1
      %p78 = por %p76, %p77
      %p79 = scmp.ne.s32.totalorder %s71, %s74
      %p80 = scmp.eq.s32.totalorder %s9, 0
      %p81 = por %p79, %p80
      %p82 = scmp.ne.s32.totalorder %s71, %s74
      %p83 = scmp.eq.s32.totalorder %s14, 1
      %p84 = por %p82, %p83
      %p85 = scmp.ne.s32.totalorder %s74, %s75
      %p86 = scmp.eq.s32.totalorder %s14, 0
      %p87 = por %p85, %p86
      %p88 = scmp.ne.s32.totalorder %s74, %s75
      %p89 = scmp.eq.s32.totalorder %s15, 1
      %p90 = por %p88, %p89
      %p92 = scmp.ne.s32.totalorder %s75, %s91
      %p93 = scmp.eq.s32.totalorder %s15, 0
      %p94 = por %p92, %p93
      %s95 = ssub.s32 %s9, %s16
      %p96 = scmp.eq.s32.totalorder %s95, 0
      %s98 = sadd.s32 %s97, 1
      %s99 = scalar_select %p96, %s97, %s98
      %p102 = pneg %p96
      %p103 = scmp.eq.s32.totalorder %s9, 1
      %p104 = por %p102, %p103
      %p105 = scmp.ne.s32.totalorder %s97, %s100
      %p106 = scmp.eq.s32.totalorder %s9, 0
      %p107 = por %p105, %p106
      %p108 = scmp.ne.s32.totalorder %s97, %s100
      %p109 = scmp.eq.s32.totalorder %s14, 1
      %p110 = por %p108, %p109
      %p111 = scmp.ne.s32.totalorder %s100, %s101
      %p112 = scmp.eq.s32.totalorder %s14, 0
      %p113 = por %p111, %p112
      %p114 = scmp.ne.s32.totalorder %s100, %s101
      %p115 = scmp.eq.s32.totalorder %s15, 1
      %p116 = por %p114, %p115
      %p118 = scmp.ne.s32.totalorder %s101, %s117
      %p119 = scmp.eq.s32.totalorder %s15, 0
      %p120 = por %p118, %p119
      %p121 = scmp.le.s32.totalorder 1, %s9
      %p122 = scmp.lt.s32.totalorder %s9, 3
      %p123 = pnand %p121, %p122
      %p124 = pneg %p123
      // Predicated region
      $region9: #{spatial_att.1} parent=5 // pred_check
        _
      $region10: #{spatial_att.1} parent=5 // pred_check_branch
        %126 = sbr.rel (%p123) target = $region12
      $region11: #{spatial_att.1} parent=5 // pred_region
        %s127 = ssub.s32 %s9, 1
      $region12: #{spatial_att.1} parent=5 // pred_fallthru
        _
      %p128 = scmp.lt.s32.totalorder %s9, 2
      // Predicated region
      $region13: #{spatial_att.1} parent=5 // pred_check
        %p129 = pneg %p128
      $region14: #{spatial_att.1} parent=5 // pred_check_branch
        %131 = sbr.rel (%p129) target = $region16
      $region15: #{spatial_att.1} parent=5 // pred_region
        // Predicated region
        $region17: #{spatial_att.1} parent=15 // pred_check
          %p132 = pneg %p29
        $region18: #{spatial_att.1} parent=15 // pred_check_branch
          %134 = sbr.rel (%p132) target = $region20
        $region19: #{spatial_att.1} parent=15 // pred_region
          %s135 = sand.u32 %s19, 1
          %s136 = sand.u32 %s19, 1
          %s137 = smul.addr %s136, 512
          %s138 = scalar_lea.vmem [#allocation2], %s137
          %s139 = smul.addr %s9, 8
          %s140 = scalar_lea.vmem %s0, %s139
          // Predicated region
          $region21: #{spatial_att.1} parent=19 // pred_check
            _
          $region22: #{spatial_att.1} parent=19 // pred_check_branch
            %142 = sbr.rel (0) target = $region24
          $region23: #{spatial_att.1} parent=19 // pred_region
            // Predicated region
            $region25: #{spatial_att.1} parent=23 // pred_check
              _
            $region26: #{spatial_att.1} parent=23 // pred_check_branch
              %144 = sbr.rel (0) target = $region28
            $region27: #{spatial_att.1} parent=23 // pred_region
              // Predicated region
              $region40: #{spatial_att.1} parent=27 // pred_check
                _
              $region41: #{spatial_att.1} parent=27 // pred_check_branch
                %285 = sbr.rel (0) target = $region43
              $region42: #{spatial_att.1} parent=27 // pred_region
                loop: start=0, step=1, limit=1
                $region44: #{spatial_att.1} parent=42 // loop_pre_header
                  _
                $region45: #{spatial_att.1} parent=42 // loop_header
                  %s287 = sphi 0, %s291
                  %p288 = scmp.ge.s32.totalorder %s287, 1
                  %s292 = sphi %s140, %s140
                  %s293 = sphi %s138, %s138
                $region46: #{spatial_att.1} parent=42 // loop_header_branch
                  %290 = sbr.rel (%p288) target = $region50
                $region47: #{spatial_att.1} parent=42 // loop_body
                  %v294 = vld [vmem:[%s292] sm:$0xff]
                  %295 = vst [vmem:[%s293] sm:$0xff] %v294
                  %v296 = vld [vmem:[%s292 + $0x10] sm:$0xff]
                  %297 = vst [vmem:[%s293 + $0x8] sm:$0xff] %v296
                  %v298 = vld [vmem:[%s292 + $0x20] sm:$0xff]
                  %299 = vst [vmem:[%s293 + $0x10] sm:$0xff] %v298
                  %v300 = vld [vmem:[%s292 + $0x30] sm:$0xff]
                  %301 = vst [vmem:[%s293 + $0x18] sm:$0xff] %v300
                  %v302 = vld [vmem:[%s292 + $0x40] sm:$0xff]
                  %303 = vst [vmem:[%s293 + $0x20] sm:$0xff] %v302
                  %v304 = vld [vmem:[%s292 + $0x50] sm:$0xff]
                  %305 = vst [vmem:[%s293 + $0x28] sm:$0xff] %v304
                  %v306 = vld [vmem:[%s292 + $0x60] sm:$0xff]
                  %307 = vst [vmem:[%s293 + $0x30] sm:$0xff] %v306
                  %v308 = vld [vmem:[%s292 + $0x70] sm:$0xff]
                  %309 = vst [vmem:[%s293 + $0x38] sm:$0xff] %v308
                  %v310 = vld [vmem:[%s292 + $0x80] sm:$0xff]
                  %311 = vst [vmem:[%s293 + $0x40] sm:$0xff] %v310
                  %v312 = vld [vmem:[%s292 + $0x90] sm:$0xff]
                  %313 = vst [vmem:[%s293 + $0x48] sm:$0xff] %v312
                  %v314 = vld [vmem:[%s292 + $0xa0] sm:$0xff]
                  %315 = vst [vmem:[%s293 + $0x50] sm:$0xff] %v314
                  %v316 = vld [vmem:[%s292 + $0xb0] sm:$0xff]
                  %317 = vst [vmem:[%s293 + $0x58] sm:$0xff] %v316
                  %v318 = vld [vmem:[%s292 + $0xc0] sm:$0xff]
                  %319 = vst [vmem:[%s293 + $0x60] sm:$0xff] %v318
                  %v320 = vld [vmem:[%s292 + $0xd0] sm:$0xff]
                  %321 = vst [vmem:[%s293 + $0x68] sm:$0xff] %v320
                  %v322 = vld [vmem:[%s292 + $0xe0] sm:$0xff]
                  %323 = vst [vmem:[%s293 + $0x70] sm:$0xff] %v322
                  %v324 = vld [vmem:[%s292 + $0xf0] sm:$0xff]
                  %325 = vst [vmem:[%s293 + $0x78] sm:$0xff] %v324
                  %v326 = vld [vmem:[%s292 + $0x100] sm:$0xff]
                  %327 = vst [vmem:[%s293 + $0x80] sm:$0xff] %v326
                  %v328 = vld [vmem:[%s292 + $0x110] sm:$0xff]
                  %329 = vst [vmem:[%s293 + $0x88] sm:$0xff] %v328
                  %v330 = vld [vmem:[%s292 + $0x120] sm:$0xff]
                  %331 = vst [vmem:[%s293 + $0x90] sm:$0xff] %v330
                  %v332 = vld [vmem:[%s292 + $0x130] sm:$0xff]
                  %333 = vst [vmem:[%s293 + $0x98] sm:$0xff] %v332
                  %v334 = vld [vmem:[%s292 + $0x140] sm:$0xff]
                  %335 = vst [vmem:[%s293 + $0xa0] sm:$0xff] %v334
                  %v336 = vld [vmem:[%s292 + $0x150] sm:$0xff]
                  %337 = vst [vmem:[%s293 + $0xa8] sm:$0xff] %v336
                  %v338 = vld [vmem:[%s292 + $0x160] sm:$0xff]
                  %339 = vst [vmem:[%s293 + $0xb0] sm:$0xff] %v338
                  %v340 = vld [vmem:[%s292 + $0x170] sm:$0xff]
                  %341 = vst [vmem:[%s293 + $0xb8] sm:$0xff] %v340
                  %v342 = vld [vmem:[%s292 + $0x180] sm:$0xff]
                  %343 = vst [vmem:[%s293 + $0xc0] sm:$0xff] %v342
                  %v344 = vld [vmem:[%s292 + $0x190] sm:$0xff]
                  %345 = vst [vmem:[%s293 + $0xc8] sm:$0xff] %v344
                  %v346 = vld [vmem:[%s292 + $0x1a0] sm:$0xff]
                  %347 = vst [vmem:[%s293 + $0xd0] sm:$0xff] %v346
                  %v348 = vld [vmem:[%s292 + $0x1b0] sm:$0xff]
                  %349 = vst [vmem:[%s293 + $0xd8] sm:$0xff] %v348
                  %v350 = vld [vmem:[%s292 + $0x1c0] sm:$0xff]
                  %351 = vst [vmem:[%s293 + $0xe0] sm:$0xff] %v350
                  %v352 = vld [vmem:[%s292 + $0x1d0] sm:$0xff]
                  %353 = vst [vmem:[%s293 + $0xe8] sm:$0xff] %v352
                  %v354 = vld [vmem:[%s292 + $0x1e0] sm:$0xff]
                  %355 = vst [vmem:[%s293 + $0xf0] sm:$0xff] %v354
                  %v356 = vld [vmem:[%s292 + $0x1f0] sm:$0xff]
                  %357 = vst [vmem:[%s293 + $0xf8] sm:$0xff] %v356
                  %v358 = vld [vmem:[%s292 + $0x200] sm:$0xff]
                  %359 = vst [vmem:[%s293 + $0x100] sm:$0xff] %v358
                  %v360 = vld [vmem:[%s292 + $0x210] sm:$0xff]
                  %361 = vst [vmem:[%s293 + $0x108] sm:$0xff] %v360
                  %v362 = vld [vmem:[%s292 + $0x220] sm:$0xff]
                  %363 = vst [vmem:[%s293 + $0x110] sm:$0xff] %v362
                  %v364 = vld [vmem:[%s292 + $0x230] sm:$0xff]
                  %365 = vst [vmem:[%s293 + $0x118] sm:$0xff] %v364
                  %v366 = vld [vmem:[%s292 + $0x240] sm:$0xff]
                  %367 = vst [vmem:[%s293 + $0x120] sm:$0xff] %v366
                  %v368 = vld [vmem:[%s292 + $0x250] sm:$0xff]
                  %369 = vst [vmem:[%s293 + $0x128] sm:$0xff] %v368
                  %v370 = vld [vmem:[%s292 + $0x260] sm:$0xff]
                  %371 = vst [vmem:[%s293 + $0x130] sm:$0xff] %v370
                  %v372 = vld [vmem:[%s292 + $0x270] sm:$0xff]
                  %373 = vst [vmem:[%s293 + $0x138] sm:$0xff] %v372
                  %v374 = vld [vmem:[%s292 + $0x280] sm:$0xff]
                  %375 = vst [vmem:[%s293 + $0x140] sm:$0xff] %v374
                  %v376 = vld [vmem:[%s292 + $0x290] sm:$0xff]
                  %377 = vst [vmem:[%s293 + $0x148] sm:$0xff] %v376
                  %v378 = vld [vmem:[%s292 + $0x2a0] sm:$0xff]
                  %379 = vst [vmem:[%s293 + $0x150] sm:$0xff] %v378
                  %v380 = vld [vmem:[%s292 + $0x2b0] sm:$0xff]
                  %381 = vst [vmem:[%s293 + $0x158] sm:$0xff] %v380
                  %v382 = vld [vmem:[%s292 + $0x2c0] sm:$0xff]
                  %383 = vst [vmem:[%s293 + $0x160] sm:$0xff] %v382
                  %v384 = vld [vmem:[%s292 + $0x2d0] sm:$0xff]
                  %385 = vst [vmem:[%s293 + $0x168] sm:$0xff] %v384
                  %v386 = vld [vmem:[%s292 + $0x2e0] sm:$0xff]
                  %387 = vst [vmem:[%s293 + $0x170] sm:$0xff] %v386
                  %v388 = vld [vmem:[%s292 + $0x2f0] sm:$0xff]
                  %389 = vst [vmem:[%s293 + $0x178] sm:$0xff] %v388
                  %v390 = vld [vmem:[%s292 + $0x300] sm:$0xff]
                  %391 = vst [vmem:[%s293 + $0x180] sm:$0xff] %v390
                  %v392 = vld [vmem:[%s292 + $0x310] sm:$0xff]
                  %393 = vst [vmem:[%s293 + $0x188] sm:$0xff] %v392
                  %v394 = vld [vmem:[%s292 + $0x320] sm:$0xff]
                  %395 = vst [vmem:[%s293 + $0x190] sm:$0xff] %v394
                  %v396 = vld [vmem:[%s292 + $0x330] sm:$0xff]
                  %397 = vst [vmem:[%s293 + $0x198] sm:$0xff] %v396
                  %v398 = vld [vmem:[%s292 + $0x340] sm:$0xff]
                  %399 = vst [vmem:[%s293 + $0x1a0] sm:$0xff] %v398
                  %v400 = vld [vmem:[%s292 + $0x350] sm:$0xff]
                  %401 = vst [vmem:[%s293 + $0x1a8] sm:$0xff] %v400
                  %v402 = vld [vmem:[%s292 + $0x360] sm:$0xff]
                  %403 = vst [vmem:[%s293 + $0x1b0] sm:$0xff] %v402
                  %v404 = vld [vmem:[%s292 + $0x370] sm:$0xff]
                  %405 = vst [vmem:[%s293 + $0x1b8] sm:$0xff] %v404
                  %v406 = vld [vmem:[%s292 + $0x380] sm:$0xff]
                  %407 = vst [vmem:[%s293 + $0x1c0] sm:$0xff] %v406
                  %v408 = vld [vmem:[%s292 + $0x390] sm:$0xff]
                  %409 = vst [vmem:[%s293 + $0x1c8] sm:$0xff] %v408
                  %v410 = vld [vmem:[%s292 + $0x3a0] sm:$0xff]
                  %411 = vst [vmem:[%s293 + $0x1d0] sm:$0xff] %v410
                  %v412 = vld [vmem:[%s292 + $0x3b0] sm:$0xff]
                  %413 = vst [vmem:[%s293 + $0x1d8] sm:$0xff] %v412
                  %v414 = vld [vmem:[%s292 + $0x3c0] sm:$0xff]
                  %415 = vst [vmem:[%s293 + $0x1e0] sm:$0xff] %v414
                  %v416 = vld [vmem:[%s292 + $0x3d0] sm:$0xff]
                  %417 = vst [vmem:[%s293 + $0x1e8] sm:$0xff] %v416
                  %v418 = vld [vmem:[%s292 + $0x3e0] sm:$0xff]
                  %419 = vst [vmem:[%s293 + $0x1f0] sm:$0xff] %v418
                  %v420 = vld [vmem:[%s292 + $0x3f0] sm:$0xff]
                  %421 = vst [vmem:[%s293 + $0x1f8] sm:$0xff] %v420
                $region48: #{spatial_att.1} parent=42 // loop_footer
                  %s291 = sadd.s32 1, %s287
                $region49: #{spatial_att.1} parent=42 // loop_footer_branch
                  %286 = sbr.rel target = $region45
                $region50: #{spatial_att.1} parent=42 // loop_exit
                  _
              $region43: #{spatial_att.1} parent=27 // pred_fallthru
                _
              // Predicated region
              $region51: #{spatial_att.1} parent=27 // pred_check
                _
              $region52: #{spatial_att.1} parent=27 // pred_check_branch
                %423 = sbr.rel target = $region54
              $region53: #{spatial_att.1} parent=27 // pred_region
                _
              $region54: #{spatial_att.1} parent=27 // pred_fallthru
                _
            $region28: #{spatial_att.1} parent=23 // pred_fallthru
              _
            // Predicated region
            $region29: #{spatial_att.1} parent=23 // pred_check
              _
            $region30: #{spatial_att.1} parent=23 // pred_check_branch
              %146 = sbr.rel target = $region32
            $region31: #{spatial_att.1} parent=23 // pred_region
              loop: start=0, step=1, limit=1
              $region33: #{spatial_att.1} parent=31 // loop_pre_header
                _
              $region34: #{spatial_att.1} parent=31 // loop_header
                %s149 = sphi 0, %s153
                %p150 = scmp.ge.s32.totalorder %s149, 1
                %s154 = sphi %s140, %s140
                %s155 = sphi %s138, %s138
              $region35: #{spatial_att.1} parent=31 // loop_header_branch
                %152 = sbr.rel (%p150) target = $region39
              $region36: #{spatial_att.1} parent=31 // loop_body
                %v156 = vld [vmem:[%s154] sm:$0xff]
                %157 = vst [vmem:[%s155] sm:$0xff] %v156
                %v158 = vld [vmem:[%s154 + $0x10] sm:$0xff]
                %159 = vst [vmem:[%s155 + $0x8] sm:$0xff] %v158
                %v160 = vld [vmem:[%s154 + $0x20] sm:$0xff]
                %161 = vst [vmem:[%s155 + $0x10] sm:$0xff] %v160
                %v162 = vld [vmem:[%s154 + $0x30] sm:$0xff]
                %163 = vst [vmem:[%s155 + $0x18] sm:$0xff] %v162
                %v164 = vld [vmem:[%s154 + $0x40] sm:$0xff]
                %165 = vst [vmem:[%s155 + $0x20] sm:$0xff] %v164
                %v166 = vld [vmem:[%s154 + $0x50] sm:$0xff]
                %167 = vst [vmem:[%s155 + $0x28] sm:$0xff] %v166
                %v168 = vld [vmem:[%s154 + $0x60] sm:$0xff]
                %169 = vst [vmem:[%s155 + $0x30] sm:$0xff] %v168
                %v170 = vld [vmem:[%s154 + $0x70] sm:$0xff]
                %171 = vst [vmem:[%s155 + $0x38] sm:$0xff] %v170
                %v172 = vld [vmem:[%s154 + $0x80] sm:$0xff]
                %173 = vst [vmem:[%s155 + $0x40] sm:$0xff] %v172
                %v174 = vld [vmem:[%s154 + $0x90] sm:$0xff]
                %175 = vst [vmem:[%s155 + $0x48] sm:$0xff] %v174
                %v176 = vld [vmem:[%s154 + $0xa0] sm:$0xff]
                %177 = vst [vmem:[%s155 + $0x50] sm:$0xff] %v176
                %v178 = vld [vmem:[%s154 + $0xb0] sm:$0xff]
                %179 = vst [vmem:[%s155 + $0x58] sm:$0xff] %v178
                %v180 = vld [vmem:[%s154 + $0xc0] sm:$0xff]
                %181 = vst [vmem:[%s155 + $0x60] sm:$0xff] %v180
                %v182 = vld [vmem:[%s154 + $0xd0] sm:$0xff]
                %183 = vst [vmem:[%s155 + $0x68] sm:$0xff] %v182
                %v184 = vld [vmem:[%s154 + $0xe0] sm:$0xff]
                %185 = vst [vmem:[%s155 + $0x70] sm:$0xff] %v184
                %v186 = vld [vmem:[%s154 + $0xf0] sm:$0xff]
                %187 = vst [vmem:[%s155 + $0x78] sm:$0xff] %v186
                %v188 = vld [vmem:[%s154 + $0x100] sm:$0xff]
                %189 = vst [vmem:[%s155 + $0x80] sm:$0xff] %v188
                %v190 = vld [vmem:[%s154 + $0x110] sm:$0xff]
                %191 = vst [vmem:[%s155 + $0x88] sm:$0xff] %v190
                %v192 = vld [vmem:[%s154 + $0x120] sm:$0xff]
                %193 = vst [vmem:[%s155 + $0x90] sm:$0xff] %v192
                %v194 = vld [vmem:[%s154 + $0x130] sm:$0xff]
                %195 = vst [vmem:[%s155 + $0x98] sm:$0xff] %v194
                %v196 = vld [vmem:[%s154 + $0x140] sm:$0xff]
                %197 = vst [vmem:[%s155 + $0xa0] sm:$0xff] %v196
                %v198 = vld [vmem:[%s154 + $0x150] sm:$0xff]
                %199 = vst [vmem:[%s155 + $0xa8] sm:$0xff] %v198
                %v200 = vld [vmem:[%s154 + $0x160] sm:$0xff]
                %201 = vst [vmem:[%s155 + $0xb0] sm:$0xff] %v200
                %v202 = vld [vmem:[%s154 + $0x170] sm:$0xff]
                %203 = vst [vmem:[%s155 + $0xb8] sm:$0xff] %v202
                %v204 = vld [vmem:[%s154 + $0x180] sm:$0xff]
                %205 = vst [vmem:[%s155 + $0xc0] sm:$0xff] %v204
                %v206 = vld [vmem:[%s154 + $0x190] sm:$0xff]
                %207 = vst [vmem:[%s155 + $0xc8] sm:$0xff] %v206
                %v208 = vld [vmem:[%s154 + $0x1a0] sm:$0xff]
                %209 = vst [vmem:[%s155 + $0xd0] sm:$0xff] %v208
                %v210 = vld [vmem:[%s154 + $0x1b0] sm:$0xff]
                %211 = vst [vmem:[%s155 + $0xd8] sm:$0xff] %v210
                %v212 = vld [vmem:[%s154 + $0x1c0] sm:$0xff]
                %213 = vst [vmem:[%s155 + $0xe0] sm:$0xff] %v212
                %v214 = vld [vmem:[%s154 + $0x1d0] sm:$0xff]
                %215 = vst [vmem:[%s155 + $0xe8] sm:$0xff] %v214
                %v216 = vld [vmem:[%s154 + $0x1e0] sm:$0xff]
                %217 = vst [vmem:[%s155 + $0xf0] sm:$0xff] %v216
                %v218 = vld [vmem:[%s154 + $0x1f0] sm:$0xff]
                %219 = vst [vmem:[%s155 + $0xf8] sm:$0xff] %v218
                %v220 = vld [vmem:[%s154 + $0x200] sm:$0xff]
                %221 = vst [vmem:[%s155 + $0x100] sm:$0xff] %v220
                %v222 = vld [vmem:[%s154 + $0x210] sm:$0xff]
                %223 = vst [vmem:[%s155 + $0x108] sm:$0xff] %v222
                %v224 = vld [vmem:[%s154 + $0x220] sm:$0xff]
                %225 = vst [vmem:[%s155 + $0x110] sm:$0xff] %v224
                %v226 = vld [vmem:[%s154 + $0x230] sm:$0xff]
                %227 = vst [vmem:[%s155 + $0x118] sm:$0xff] %v226
                %v228 = vld [vmem:[%s154 + $0x240] sm:$0xff]
                %229 = vst [vmem:[%s155 + $0x120] sm:$0xff] %v228
                %v230 = vld [vmem:[%s154 + $0x250] sm:$0xff]
                %231 = vst [vmem:[%s155 + $0x128] sm:$0xff] %v230
                %v232 = vld [vmem:[%s154 + $0x260] sm:$0xff]
                %233 = vst [vmem:[%s155 + $0x130] sm:$0xff] %v232
                %v234 = vld [vmem:[%s154 + $0x270] sm:$0xff]
                %235 = vst [vmem:[%s155 + $0x138] sm:$0xff] %v234
                %v236 = vld [vmem:[%s154 + $0x280] sm:$0xff]
                %237 = vst [vmem:[%s155 + $0x140] sm:$0xff] %v236
                %v238 = vld [vmem:[%s154 + $0x290] sm:$0xff]
                %239 = vst [vmem:[%s155 + $0x148] sm:$0xff] %v238
                %v240 = vld [vmem:[%s154 + $0x2a0] sm:$0xff]
                %241 = vst [vmem:[%s155 + $0x150] sm:$0xff] %v240
                %v242 = vld [vmem:[%s154 + $0x2b0] sm:$0xff]
                %243 = vst [vmem:[%s155 + $0x158] sm:$0xff] %v242
                %v244 = vld [vmem:[%s154 + $0x2c0] sm:$0xff]
                %245 = vst [vmem:[%s155 + $0x160] sm:$0xff] %v244
                %v246 = vld [vmem:[%s154 + $0x2d0] sm:$0xff]
                %247 = vst [vmem:[%s155 + $0x168] sm:$0xff] %v246
                %v248 = vld [vmem:[%s154 + $0x2e0] sm:$0xff]
                %249 = vst [vmem:[%s155 + $0x170] sm:$0xff] %v248
                %v250 = vld [vmem:[%s154 + $0x2f0] sm:$0xff]
                %251 = vst [vmem:[%s155 + $0x178] sm:$0xff] %v250
                %v252 = vld [vmem:[%s154 + $0x300] sm:$0xff]
                %253 = vst [vmem:[%s155 + $0x180] sm:$0xff] %v252
                %v254 = vld [vmem:[%s154 + $0x310] sm:$0xff]
                %255 = vst [vmem:[%s155 + $0x188] sm:$0xff] %v254
                %v256 = vld [vmem:[%s154 + $0x320] sm:$0xff]
                %257 = vst [vmem:[%s155 + $0x190] sm:$0xff] %v256
                %v258 = vld [vmem:[%s154 + $0x330] sm:$0xff]
                %259 = vst [vmem:[%s155 + $0x198] sm:$0xff] %v258
                %v260 = vld [vmem:[%s154 + $0x340] sm:$0xff]
                %261 = vst [vmem:[%s155 + $0x1a0] sm:$0xff] %v260
                %v262 = vld [vmem:[%s154 + $0x350] sm:$0xff]
                %263 = vst [vmem:[%s155 + $0x1a8] sm:$0xff] %v262
                %v264 = vld [vmem:[%s154 + $0x360] sm:$0xff]
                %265 = vst [vmem:[%s155 + $0x1b0] sm:$0xff] %v264
                %v266 = vld [vmem:[%s154 + $0x370] sm:$0xff]
                %267 = vst [vmem:[%s155 + $0x1b8] sm:$0xff] %v266
                %v268 = vld [vmem:[%s154 + $0x380] sm:$0xff]
                %269 = vst [vmem:[%s155 + $0x1c0] sm:$0xff] %v268
                %v270 = vld [vmem:[%s154 + $0x390] sm:$0xff]
                %271 = vst [vmem:[%s155 + $0x1c8] sm:$0xff] %v270
                %v272 = vld [vmem:[%s154 + $0x3a0] sm:$0xff]
                %273 = vst [vmem:[%s155 + $0x1d0] sm:$0xff] %v272
                %v274 = vld [vmem:[%s154 + $0x3b0] sm:$0xff]
                %275 = vst [vmem:[%s155 + $0x1d8] sm:$0xff] %v274
                %v276 = vld [vmem:[%s154 + $0x3c0] sm:$0xff]
                %277 = vst [vmem:[%s155 + $0x1e0] sm:$0xff] %v276
                %v278 = vld [vmem:[%s154 + $0x3d0] sm:$0xff]
                %279 = vst [vmem:[%s155 + $0x1e8] sm:$0xff] %v278
                %v280 = vld [vmem:[%s154 + $0x3e0] sm:$0xff]
                %281 = vst [vmem:[%s155 + $0x1f0] sm:$0xff] %v280
                %v282 = vld [vmem:[%s154 + $0x3f0] sm:$0xff]
                %283 = vst [vmem:[%s155 + $0x1f8] sm:$0xff] %v282
              $region37: #{spatial_att.1} parent=31 // loop_footer
                %s153 = sadd.s32 1, %s149
              $region38: #{spatial_att.1} parent=31 // loop_footer_branch
                %148 = sbr.rel target = $region34
              $region39: #{spatial_att.1} parent=31 // loop_exit
                _
            $region32: #{spatial_att.1} parent=23 // pred_fallthru
              _
          $region24: #{spatial_att.1} parent=19 // pred_fallthru
            _
          %424 = vnop
        $region20: #{spatial_att.1} parent=15 // pred_fallthru
          _
        // Predicated region
        $region55: #{spatial_att.1} parent=15 // pred_check
          %p425 = pneg %p55
        $region56: #{spatial_att.1} parent=15 // pred_check_branch
          %427 = sbr.rel (%p425) target = $region58
        $region57: #{spatial_att.1} parent=15 // pred_region
          %p428 = scmp.lt.s32.totalorder %s9, 1
          %s429 = scalar_select %p428, %s9, 1
          %s430 = scalar_lea.vmem %s1, %s429
        $region58: #{spatial_att.1} parent=15 // pred_fallthru
          _
        // Predicated region
        $region59: #{spatial_att.1} parent=15 // pred_check
          %p431 = pneg %p81
        $region60: #{spatial_att.1} parent=15 // pred_check_branch
          %433 = sbr.rel (%p431) target = $region62
        $region61: #{spatial_att.1} parent=15 // pred_region
          %p434 = scmp.lt.s32.totalorder %s9, 1
          %s435 = scalar_select %p434, %s9, 1
          %s436 = scalar_lea.vmem %s2, %s435
        $region62: #{spatial_att.1} parent=15 // pred_fallthru
          _
      $region16: #{spatial_att.1} parent=5 // pred_fallthru
        _
      %p437 = scmp.le.s32.totalorder 1, %s9
      %p438 = scmp.lt.s32.totalorder %s9, 3
      %p439 = pnand %p437, %p438
      %p440 = pneg %p439
      // Predicated region
      $region63: #{spatial_att.1} parent=5 // pred_check
        _
      $region64: #{spatial_att.1} parent=5 // pred_check_branch
        %442 = sbr.rel (%p439) target = $region66
      $region65: #{spatial_att.1} parent=5 // pred_region
        %s443 = ssub.s32 %s9, 1
        %s444 = sand.u32 %s22, 1
        %s445 = sand.u32 %s22, 1
        %s446 = smul.addr %s445, 512
        %s447 = scalar_lea.vmem [#allocation2], %s446
        // Predicated region
        $region67: #{spatial_att.1} parent=65 // pred_check
          %p448 = pneg %p35
        $region68: #{spatial_att.1} parent=65 // pred_check_branch
          %450 = sbr.rel (%p448) target = $region70
        $region69: #{spatial_att.1} parent=65 // pred_region
          _
        $region70: #{spatial_att.1} parent=65 // pred_fallthru
          _
        %s451 = sand.u32 %s22, 1
        %s452 = sand.u32 %s22, 1
        %s453 = smul.addr %s452, 512
        %s454 = scalar_lea.vmem [#allocation2], %s453
        %p455 = pneg %p35
        %p456 = pneg %p32
        %p457 = scmp.lt.s32.totalorder %s14, 1
        %s458 = scalar_select %p457, %s14, 1
        %s459 = scalar_lea.vmem %s1, %s458
        %p460 = pneg %p61
        %p461 = pneg %p58
        %p462 = scmp.lt.s32.totalorder %s14, 1
        %s463 = scalar_select %p462, %s14, 1
        %s464 = scalar_lea.vmem %s2, %s463
        %p465 = pneg %p87
        %p466 = pneg %p84
        %p467 = pneg %p113
        %p468 = pneg %p110
        %s469 = sand.u32 %s100, 1
        %s470 = sand.u32 %s100, 1
        %s471 = smul.addr %s470, 512
        %s472 = scalar_lea.vmem [#allocation3], %s471
        %p473 = scmp.lt.s32.totalorder %s14, 1
        %s474 = scalar_select %p473, %s14, 1
        %s475 = scalar_lea.vmem %s1, %s474
        %p476 = scmp.lt.s32.totalorder %s14, 1
        %s477 = scalar_select %p476, %s14, 1
        %s478 = scalar_lea.vmem %s2, %s477
        %v479 = vld [vmem:[%s447] sm:$0xff]
        %v480 = vld [vmem:[%s447 + $0x8] sm:$0xff]
        %v481 = vld [vmem:[%s447 + $0x10] sm:$0xff]
        %v482 = vld [vmem:[%s447 + $0x18] sm:$0xff]
        %v483 = vld [vmem:[%s447 + $0x20] sm:$0xff]
        %v484 = vld [vmem:[%s447 + $0x28] sm:$0xff]
        %v485 = vld [vmem:[%s447 + $0x30] sm:$0xff]
        %v486 = vld [vmem:[%s447 + $0x38] sm:$0xff]
        %v487 = vld [vmem:[%s447 + $0x40] sm:$0xff]
        %v488 = vld [vmem:[%s447 + $0x48] sm:$0xff]
        %v489 = vld [vmem:[%s447 + $0x50] sm:$0xff]
        %v490 = vld [vmem:[%s447 + $0x58] sm:$0xff]
        %v491 = vld [vmem:[%s447 + $0x60] sm:$0xff]
        %v492 = vld [vmem:[%s447 + $0x68] sm:$0xff]
        %v493 = vld [vmem:[%s447 + $0x70] sm:$0xff]
        %v494 = vld [vmem:[%s447 + $0x78] sm:$0xff]
        %v495 = vld [vmem:[%s447 + $0x80] sm:$0xff]
        %v496 = vld [vmem:[%s447 + $0x88] sm:$0xff]
        %v497 = vld [vmem:[%s447 + $0x90] sm:$0xff]
        %v498 = vld [vmem:[%s447 + $0x98] sm:$0xff]
        %v499 = vld [vmem:[%s447 + $0xa0] sm:$0xff]
        %v500 = vld [vmem:[%s447 + $0xa8] sm:$0xff]
        %v501 = vld [vmem:[%s447 + $0xb0] sm:$0xff]
        %v502 = vld [vmem:[%s447 + $0xb8] sm:$0xff]
        %v503 = vld [vmem:[%s447 + $0xc0] sm:$0xff]
        %v504 = vld [vmem:[%s447 + $0xc8] sm:$0xff]
        %v505 = vld [vmem:[%s447 + $0xd0] sm:$0xff]
        %v506 = vld [vmem:[%s447 + $0xd8] sm:$0xff]
        %v507 = vld [vmem:[%s447 + $0xe0] sm:$0xff]
        %v508 = vld [vmem:[%s447 + $0xe8] sm:$0xff]
        %v509 = vld [vmem:[%s447 + $0xf0] sm:$0xff]
        %v510 = vld [vmem:[%s447 + $0xf8] sm:$0xff]
        %v511 = vld [vmem:[%s447 + $0x100] sm:$0xff]
        %v512 = vld [vmem:[%s447 + $0x108] sm:$0xff]
        %v513 = vld [vmem:[%s447 + $0x110] sm:$0xff]
        %v514 = vld [vmem:[%s447 + $0x118] sm:$0xff]
        %v515 = vld [vmem:[%s447 + $0x120] sm:$0xff]
        %v516 = vld [vmem:[%s447 + $0x128] sm:$0xff]
        %v517 = vld [vmem:[%s447 + $0x130] sm:$0xff]
        %v518 = vld [vmem:[%s447 + $0x138] sm:$0xff]
        %v519 = vld [vmem:[%s447 + $0x140] sm:$0xff]
        %v520 = vld [vmem:[%s447 + $0x148] sm:$0xff]
        %v521 = vld [vmem:[%s447 + $0x150] sm:$0xff]
        %v522 = vld [vmem:[%s447 + $0x158] sm:$0xff]
        %v523 = vld [vmem:[%s447 + $0x160] sm:$0xff]
        %v524 = vld [vmem:[%s447 + $0x168] sm:$0xff]
        %v525 = vld [vmem:[%s447 + $0x170] sm:$0xff]
        %v526 = vld [vmem:[%s447 + $0x178] sm:$0xff]
        %v527 = vld [vmem:[%s447 + $0x180] sm:$0xff]
        %v528 = vld [vmem:[%s447 + $0x188] sm:$0xff]
        %v529 = vld [vmem:[%s447 + $0x190] sm:$0xff]
        %v530 = vld [vmem:[%s447 + $0x198] sm:$0xff]
        %v531 = vld [vmem:[%s447 + $0x1a0] sm:$0xff]
        %v532 = vld [vmem:[%s447 + $0x1a8] sm:$0xff]
        %v533 = vld [vmem:[%s447 + $0x1b0] sm:$0xff]
        %v534 = vld [vmem:[%s447 + $0x1b8] sm:$0xff]
        %v535 = vld [vmem:[%s447 + $0x1c0] sm:$0xff]
        %v536 = vld [vmem:[%s447 + $0x1c8] sm:$0xff]
        %v537 = vld [vmem:[%s447 + $0x1d0] sm:$0xff]
        %v538 = vld [vmem:[%s447 + $0x1d8] sm:$0xff]
        %v539 = vld [vmem:[%s447 + $0x1e0] sm:$0xff]
        %v540 = vld [vmem:[%s447 + $0x1e8] sm:$0xff]
        %v541 = vld [vmem:[%s447 + $0x1f0] sm:$0xff]
        %v542 = vld [vmem:[%s447 + $0x1f8] sm:$0xff]
        %v543 = vadd.f32 %v479, %v480
        %v544 = vadd.f32 %v543, %v481
        %v545 = vadd.f32 %v544, %v482
        %v546 = vadd.f32 %v545, %v483
        %v547 = vadd.f32 %v546, %v484
        %v548 = vadd.f32 %v547, %v485
        %v549 = vadd.f32 %v548, %v486
        %v550 = vadd.f32 %v549, %v487
        %v551 = vadd.f32 %v550, %v488
        %v552 = vadd.f32 %v551, %v489
        %v553 = vadd.f32 %v552, %v490
        %v554 = vadd.f32 %v553, %v491
        %v555 = vadd.f32 %v554, %v492
        %v556 = vadd.f32 %v555, %v493
        %v557 = vadd.f32 %v556, %v494
        %v558 = vadd.f32 %v557, %v495
        %v559 = vadd.f32 %v558, %v496
        %v560 = vadd.f32 %v559, %v497
        %v561 = vadd.f32 %v560, %v498
        %v562 = vadd.f32 %v561, %v499
        %v563 = vadd.f32 %v562, %v500
        %v564 = vadd.f32 %v563, %v501
        %v565 = vadd.f32 %v564, %v502
        %v566 = vadd.f32 %v565, %v503
        %v567 = vadd.f32 %v566, %v504
        %v568 = vadd.f32 %v567, %v505
        %v569 = vadd.f32 %v568, %v506
        %v570 = vadd.f32 %v569, %v507
        %v571 = vadd.f32 %v570, %v508
        %v572 = vadd.f32 %v571, %v509
        %v573 = vadd.f32 %v572, %v510
        %v574 = vadd.f32 %v573, %v511
        %v575 = vadd.f32 %v574, %v512
        %v576 = vadd.f32 %v575, %v513
        %v577 = vadd.f32 %v576, %v514
        %v578 = vadd.f32 %v577, %v515
        %v579 = vadd.f32 %v578, %v516
        %v580 = vadd.f32 %v579, %v517
        %v581 = vadd.f32 %v580, %v518
        %v582 = vadd.f32 %v581, %v519
        %v583 = vadd.f32 %v582, %v520
        %v584 = vadd.f32 %v583, %v521
        %v585 = vadd.f32 %v584, %v522
        %v586 = vadd.f32 %v585, %v523
        %v587 = vadd.f32 %v586, %v524
        %v588 = vadd.f32 %v587, %v525
        %v589 = vadd.f32 %v588, %v526
        %v590 = vadd.f32 %v589, %v527
        %v591 = vadd.f32 %v590, %v528
        %v592 = vadd.f32 %v591, %v529
        %v593 = vadd.f32 %v592, %v530
        %v594 = vadd.f32 %v593, %v531
        %v595 = vadd.f32 %v594, %v532
        %v596 = vadd.f32 %v595, %v533
        %v597 = vadd.f32 %v596, %v534
        %v598 = vadd.f32 %v597, %v535
        %v599 = vadd.f32 %v598, %v536
        %v600 = vadd.f32 %v599, %v537
        %v601 = vadd.f32 %v600, %v538
        %v602 = vadd.f32 %v601, %v539
        %v603 = vadd.f32 %v602, %v540
        %v604 = vadd.f32 %v603, %v541
        %v605 = vadd.f32 %v604, %v542
        %v606 = vrot.slane %v605, 4
        %v607 = vadd.f32 %v605, %v606
        %v608 = vrot.slane %v607, 2
        %v609 = vadd.f32 %v607, %v608
        %v610 = vrot.slane %v609, 1
        %v611 = vadd.f32 %v609, %v610
        %v612 = vmul.f32 %v479, %v479
        %v613 = vmul.f32 %v480, %v480
        %v614 = vmul.f32 %v481, %v481
        %v615 = vmul.f32 %v482, %v482
        %v616 = vmul.f32 %v483, %v483
        %v617 = vmul.f32 %v484, %v484
        %v618 = vmul.f32 %v485, %v485
        %v619 = vmul.f32 %v486, %v486
        %v620 = vmul.f32 %v487, %v487
        %v621 = vmul.f32 %v488, %v488
        %v622 = vmul.f32 %v489, %v489
        %v623 = vmul.f32 %v490, %v490
        %v624 = vmul.f32 %v491, %v491
        %v625 = vmul.f32 %v492, %v492
        %v626 = vmul.f32 %v493, %v493
        %v627 = vmul.f32 %v494, %v494
        %v628 = vmul.f32 %v495, %v495
        %v629 = vmul.f32 %v496, %v496
        %v630 = vmul.f32 %v497, %v497
        %v631 = vmul.f32 %v498, %v498
        %v632 = vmul.f32 %v499, %v499
        %v633 = vmul.f32 %v500, %v500
        %v634 = vmul.f32 %v501, %v501
        %v635 = vmul.f32 %v502, %v502
        %v636 = vmul.f32 %v503, %v503
        %v637 = vmul.f32 %v504, %v504
        %v638 = vmul.f32 %v505, %v505
        %v639 = vmul.f32 %v506, %v506
        %v640 = vmul.f32 %v507, %v507
        %v641 = vmul.f32 %v508, %v508
        %v642 = vmul.f32 %v509, %v509
        %v643 = vmul.f32 %v510, %v510
        %v644 = vmul.f32 %v511, %v511
        %v645 = vmul.f32 %v512, %v512
        %v646 = vmul.f32 %v513, %v513
        %v647 = vmul.f32 %v514, %v514
        %v648 = vmul.f32 %v515, %v515
        %v649 = vmul.f32 %v516, %v516
        %v650 = vmul.f32 %v517, %v517
        %v651 = vmul.f32 %v518, %v518
        %v652 = vmul.f32 %v519, %v519
        %v653 = vmul.f32 %v520, %v520
        %v654 = vmul.f32 %v521, %v521
        %v655 = vmul.f32 %v522, %v522
        %v656 = vmul.f32 %v523, %v523
        %v657 = vmul.f32 %v524, %v524
        %v658 = vmul.f32 %v525, %v525
        %v659 = vmul.f32 %v526, %v526
        %v660 = vmul.f32 %v527, %v527
        %v661 = vmul.f32 %v528, %v528
        %v662 = vmul.f32 %v529, %v529
        %v663 = vmul.f32 %v530, %v530
        %v664 = vmul.f32 %v531, %v531
        %v665 = vmul.f32 %v532, %v532
        %v666 = vmul.f32 %v533, %v533
        %v667 = vmul.f32 %v534, %v534
        %v668 = vmul.f32 %v535, %v535
        %v669 = vmul.f32 %v536, %v536
        %v670 = vmul.f32 %v537, %v537
        %v671 = vmul.f32 %v538, %v538
        %v672 = vmul.f32 %v539, %v539
        %v673 = vmul.f32 %v540, %v540
        %v674 = vmul.f32 %v541, %v541
        %v675 = vmul.f32 %v542, %v542
        %v676 = vadd.f32 %v612, %v613
        %v677 = vadd.f32 %v676, %v614
        %v678 = vadd.f32 %v677, %v615
        %v679 = vadd.f32 %v678, %v616
        %v680 = vadd.f32 %v679, %v617
        %v681 = vadd.f32 %v680, %v618
        %v682 = vadd.f32 %v681, %v619
        %v683 = vadd.f32 %v682, %v620
        %v684 = vadd.f32 %v683, %v621
        %v685 = vadd.f32 %v684, %v622
        %v686 = vadd.f32 %v685, %v623
        %v687 = vadd.f32 %v686, %v624
        %v688 = vadd.f32 %v687, %v625
        %v689 = vadd.f32 %v688, %v626
        %v690 = vadd.f32 %v689, %v627
        %v691 = vadd.f32 %v690, %v628
        %v692 = vadd.f32 %v691, %v629
        %v693 = vadd.f32 %v692, %v630
        %v694 = vadd.f32 %v693, %v631
        %v695 = vadd.f32 %v694, %v632
        %v696 = vadd.f32 %v695, %v633
        %v697 = vadd.f32 %v696, %v634
        %v698 = vadd.f32 %v697, %v635
        %v699 = vadd.f32 %v698, %v636
        %v700 = vadd.f32 %v699, %v637
        %v701 = vadd.f32 %v700, %v638
        %v702 = vadd.f32 %v701, %v639
        %v703 = vadd.f32 %v702, %v640
        %v704 = vadd.f32 %v703, %v641
        %v705 = vadd.f32 %v704, %v642
        %v706 = vadd.f32 %v705, %v643
        %v707 = vadd.f32 %v706, %v644
        %v708 = vadd.f32 %v707, %v645
        %v709 = vadd.f32 %v708, %v646
        %v710 = vadd.f32 %v709, %v647
        %v711 = vadd.f32 %v710, %v648
        %v712 = vadd.f32 %v711, %v649
        %v713 = vadd.f32 %v712, %v650
        %v714 = vadd.f32 %v713, %v651
        %v715 = vadd.f32 %v714, %v652
        %v716 = vadd.f32 %v715, %v653
        %v717 = vadd.f32 %v716, %v654
        %v718 = vadd.f32 %v717, %v655
        %v719 = vadd.f32 %v718, %v656
        %v720 = vadd.f32 %v719, %v657
        %v721 = vadd.f32 %v720, %v658
        %v722 = vadd.f32 %v721, %v659
        %v723 = vadd.f32 %v722, %v660
        %v724 = vadd.f32 %v723, %v661
        %v725 = vadd.f32 %v724, %v662
        %v726 = vadd.f32 %v725, %v663
        %v727 = vadd.f32 %v726, %v664
        %v728 = vadd.f32 %v727, %v665
        %v729 = vadd.f32 %v728, %v666
        %v730 = vadd.f32 %v729, %v667
        %v731 = vadd.f32 %v730, %v668
        %v732 = vadd.f32 %v731, %v669
        %v733 = vadd.f32 %v732, %v670
        %v734 = vadd.f32 %v733, %v671
        %v735 = vadd.f32 %v734, %v672
        %v736 = vadd.f32 %v735, %v673
        %v737 = vadd.f32 %v736, %v674
        %v738 = vadd.f32 %v737, %v675
        %v739 = vrot.slane %v738, 4
        %v740 = vadd.f32 %v738, %v739
        %v741 = vrot.slane %v740, 2
        %v742 = vadd.f32 %v740, %v741
        %v743 = vrot.slane %v742, 1
        %v744 = vadd.f32 %v742, %v743
        %v745 = vmul.f32 %v611, 0.001953125
        %v746 = vmul.f32 %v744, 0.001953125
        %v747 = vmul.f32 %v745, %v745
        %v748 = vsub.f32 %v746, %v747
        %v749 = vmax.f32 %v748, 0.0
        %v750 = vadd.f32 %v749, 1e-05
        %v751 = vrsqrt.pop %v750
        %v752 = vld [vmem:[%s475] sm:$0x1]
        %v753 = vmul.f32 %v752, %v751
        %v754 = vld [vmem:[%s478] sm:$0x1]
        %v755 = vmul.f32 %v745, %v753
        %v756 = vsub.f32 %v754, %v755
        %v758 = vlaneseq
        %v759 = vshrl.u32 %v758, 7
        %v760 = vsub.s32 0, %v759
        %v761 = vrot.slane %v753, %v760
        %v763 = vmul.f32 %v479, %v761
        %v764 = vmul.f32 %v480, %v761
        %v765 = vmul.f32 %v481, %v761
        %v766 = vmul.f32 %v482, %v761
        %v767 = vmul.f32 %v483, %v761
        %v768 = vmul.f32 %v484, %v761
        %v769 = vmul.f32 %v485, %v761
        %v770 = vmul.f32 %v486, %v761
        %v771 = vmul.f32 %v487, %v761
        %v772 = vmul.f32 %v488, %v761
        %v773 = vmul.f32 %v489, %v761
        %v774 = vmul.f32 %v490, %v761
        %v775 = vmul.f32 %v491, %v761
        %v776 = vmul.f32 %v492, %v761
        %v777 = vmul.f32 %v493, %v761
        %v778 = vmul.f32 %v494, %v761
        %v779 = vmul.f32 %v495, %v761
        %v780 = vmul.f32 %v496, %v761
        %v781 = vmul.f32 %v497, %v761
        %v782 = vmul.f32 %v498, %v761
        %v783 = vmul.f32 %v499, %v761
        %v784 = vmul.f32 %v500, %v761
        %v785 = vmul.f32 %v501, %v761
        %v786 = vmul.f32 %v502, %v761
        %v787 = vmul.f32 %v503, %v761
        %v788 = vmul.f32 %v504, %v761
        %v789 = vmul.f32 %v505, %v761
        %v790 = vmul.f32 %v506, %v761
        %v791 = vmul.f32 %v507, %v761
        %v792 = vmul.f32 %v508, %v761
        %v793 = vmul.f32 %v509, %v761
        %v794 = vmul.f32 %v510, %v761
        %v795 = vmul.f32 %v511, %v761
        %v796 = vmul.f32 %v512, %v761
        %v797 = vmul.f32 %v513, %v761
        %v798 = vmul.f32 %v514, %v761
        %v799 = vmul.f32 %v515, %v761
        %v800 = vmul.f32 %v516, %v761
        %v801 = vmul.f32 %v517, %v761
        %v802 = vmul.f32 %v518, %v761
        %v803 = vmul.f32 %v519, %v761
        %v804 = vmul.f32 %v520, %v761
        %v805 = vmul.f32 %v521, %v761
        %v806 = vmul.f32 %v522, %v761
        %v807 = vmul.f32 %v523, %v761
        %v808 = vmul.f32 %v524, %v761
        %v809 = vmul.f32 %v525, %v761
        %v810 = vmul.f32 %v526, %v761
        %v811 = vmul.f32 %v527, %v761
        %v812 = vmul.f32 %v528, %v761
        %v813 = vmul.f32 %v529, %v761
        %v814 = vmul.f32 %v530, %v761
        %v815 = vmul.f32 %v531, %v761
        %v816 = vmul.f32 %v532, %v761
        %v817 = vmul.f32 %v533, %v761
        %v818 = vmul.f32 %v534, %v761
        %v819 = vmul.f32 %v535, %v761
        %v820 = vmul.f32 %v536, %v761
        %v821 = vmul.f32 %v537, %v761
        %v822 = vmul.f32 %v538, %v761
        %v823 = vmul.f32 %v539, %v761
        %v824 = vmul.f32 %v540, %v761
        %v825 = vmul.f32 %v541, %v761
        %v826 = vmul.f32 %v542, %v761
        %v828 = vlaneseq
        %v829 = vshrl.u32 %v828, 7
        %v830 = vsub.s32 0, %v829
        %v831 = vrot.slane %v756, %v830
        %v833 = vadd.f32 %v763, %v831
        %v834 = vadd.f32 %v764, %v831
        %v835 = vadd.f32 %v765, %v831
        %v836 = vadd.f32 %v766, %v831
        %v837 = vadd.f32 %v767, %v831
        %v838 = vadd.f32 %v768, %v831
        %v839 = vadd.f32 %v769, %v831
        %v840 = vadd.f32 %v770, %v831
        %v841 = vadd.f32 %v771, %v831
        %v842 = vadd.f32 %v772, %v831
        %v843 = vadd.f32 %v773, %v831
        %v844 = vadd.f32 %v774, %v831
        %v845 = vadd.f32 %v775, %v831
        %v846 = vadd.f32 %v776, %v831
        %v847 = vadd.f32 %v777, %v831
        %v848 = vadd.f32 %v778, %v831
        %v849 = vadd.f32 %v779, %v831
        %v850 = vadd.f32 %v780, %v831
        %v851 = vadd.f32 %v781, %v831
        %v852 = vadd.f32 %v782, %v831
        %v853 = vadd.f32 %v783, %v831
        %v854 = vadd.f32 %v784, %v831
        %v855 = vadd.f32 %v785, %v831
        %v856 = vadd.f32 %v786, %v831
        %v857 = vadd.f32 %v787, %v831
        %v858 = vadd.f32 %v788, %v831
        %v859 = vadd.f32 %v789, %v831
        %v860 = vadd.f32 %v790, %v831
        %v861 = vadd.f32 %v791, %v831
        %v862 = vadd.f32 %v792, %v831
        %v863 = vadd.f32 %v793, %v831
        %v864 = vadd.f32 %v794, %v831
        %v865 = vadd.f32 %v795, %v831
        %v866 = vadd.f32 %v796, %v831
        %v867 = vadd.f32 %v797, %v831
        %v868 = vadd.f32 %v798, %v831
        %v869 = vadd.f32 %v799, %v831
        %v870 = vadd.f32 %v800, %v831
        %v871 = vadd.f32 %v801, %v831
        %v872 = vadd.f32 %v802, %v831
        %v873 = vadd.f32 %v803, %v831
        %v874 = vadd.f32 %v804, %v831
        %v875 = vadd.f32 %v805, %v831
        %v876 = vadd.f32 %v806, %v831
        %v877 = vadd.f32 %v807, %v831
        %v878 = vadd.f32 %v808, %v831
        %v879 = vadd.f32 %v809, %v831
        %v880 = vadd.f32 %v810, %v831
        %v881 = vadd.f32 %v811, %v831
        %v882 = vadd.f32 %v812, %v831
        %v883 = vadd.f32 %v813, %v831
        %v884 = vadd.f32 %v814, %v831
        %v885 = vadd.f32 %v815, %v831
        %v886 = vadd.f32 %v816, %v831
        %v887 = vadd.f32 %v817, %v831
        %v888 = vadd.f32 %v818, %v831
        %v889 = vadd.f32 %v819, %v831
        %v890 = vadd.f32 %v820, %v831
        %v891 = vadd.f32 %v821, %v831
        %v892 = vadd.f32 %v822, %v831
        %v893 = vadd.f32 %v823, %v831
        %v894 = vadd.f32 %v824, %v831
        %v895 = vadd.f32 %v825, %v831
        %v896 = vadd.f32 %v826, %v831
        %v897 = vxor.u32 %v833, 2147483648
        %v898 = vxor.u32 %v834, 2147483648
        %v899 = vxor.u32 %v835, 2147483648
        %v900 = vxor.u32 %v836, 2147483648
        %v901 = vxor.u32 %v837, 2147483648
        %v902 = vxor.u32 %v838, 2147483648
        %v903 = vxor.u32 %v839, 2147483648
        %v904 = vxor.u32 %v840, 2147483648
        %v905 = vxor.u32 %v841, 2147483648
        %v906 = vxor.u32 %v842, 2147483648
        %v907 = vxor.u32 %v843, 2147483648
        %v908 = vxor.u32 %v844, 2147483648
        %v909 = vxor.u32 %v845, 2147483648
        %v910 = vxor.u32 %v846, 2147483648
        %v911 = vxor.u32 %v847, 2147483648
        %v912 = vxor.u32 %v848, 2147483648
        %v913 = vxor.u32 %v849, 2147483648
        %v914 = vxor.u32 %v850, 2147483648
        %v915 = vxor.u32 %v851, 2147483648
        %v916 = vxor.u32 %v852, 2147483648
        %v917 = vxor.u32 %v853, 2147483648
        %v918 = vxor.u32 %v854, 2147483648
        %v919 = vxor.u32 %v855, 2147483648
        %v920 = vxor.u32 %v856, 2147483648
        %v921 = vxor.u32 %v857, 2147483648
        %v922 = vxor.u32 %v858, 2147483648
        %v923 = vxor.u32 %v859, 2147483648
        %v924 = vxor.u32 %v860, 2147483648
        %v925 = vxor.u32 %v861, 2147483648
        %v926 = vxor.u32 %v862, 2147483648
        %v927 = vxor.u32 %v863, 2147483648
        %v928 = vxor.u32 %v864, 2147483648
        %v929 = vxor.u32 %v865, 2147483648
        %v930 = vxor.u32 %v866, 2147483648
        %v931 = vxor.u32 %v867, 2147483648
        %v932 = vxor.u32 %v868, 2147483648
        %v933 = vxor.u32 %v869, 2147483648
        %v934 = vxor.u32 %v870, 2147483648
        %v935 = vxor.u32 %v871, 2147483648
        %v936 = vxor.u32 %v872, 2147483648
        %v937 = vxor.u32 %v873, 2147483648
        %v938 = vxor.u32 %v874, 2147483648
        %v939 = vxor.u32 %v875, 2147483648
        %v940 = vxor.u32 %v876, 2147483648
        %v941 = vxor.u32 %v877, 2147483648
        %v942 = vxor.u32 %v878, 2147483648
        %v943 = vxor.u32 %v879, 2147483648
        %v944 = vxor.u32 %v880, 2147483648
        %v945 = vxor.u32 %v881, 2147483648
        %v946 = vxor.u32 %v882, 2147483648
        %v947 = vxor.u32 %v883, 2147483648
        %v948 = vxor.u32 %v884, 2147483648
        %v949 = vxor.u32 %v885, 2147483648
        %v950 = vxor.u32 %v886, 2147483648
        %v951 = vxor.u32 %v887, 2147483648
        %v952 = vxor.u32 %v888, 2147483648
        %v953 = vxor.u32 %v889, 2147483648
        %v954 = vxor.u32 %v890, 2147483648
        %v955 = vxor.u32 %v891, 2147483648
        %v956 = vxor.u32 %v892, 2147483648
        %v957 = vxor.u32 %v893, 2147483648
        %v958 = vxor.u32 %v894, 2147483648
        %v959 = vxor.u32 %v895, 2147483648
        %v960 = vxor.u32 %v896, 2147483648
        %v961 = vmul.f32 %v897, 1.442695
        %v962 = vpow.pop %v961
        %v963 = vmul.f32 %v898, 1.442695
        %v964 = vpow.pop %v963
        %v965 = vmul.f32 %v899, 1.442695
        %v966 = vpow.pop %v965
        %v967 = vmul.f32 %v900, 1.442695
        %v968 = vpow.pop %v967
        %v969 = vmul.f32 %v901, 1.442695
        %v970 = vpow.pop %v969
        %v971 = vmul.f32 %v902, 1.442695
        %v972 = vpow.pop %v971
        %v973 = vmul.f32 %v903, 1.442695
        %v974 = vpow.pop %v973
        %v975 = vmul.f32 %v904, 1.442695
        %v976 = vpow.pop %v975
        %v977 = vmul.f32 %v905, 1.442695
        %v978 = vpow.pop %v977
        %v979 = vmul.f32 %v906, 1.442695
        %v980 = vpow.pop %v979
        %v981 = vmul.f32 %v907, 1.442695
        %v982 = vpow.pop %v981
        %v983 = vmul.f32 %v908, 1.442695
        %v984 = vpow.pop %v983
        %v985 = vmul.f32 %v909, 1.442695
        %v986 = vpow.pop %v985
        %v987 = vmul.f32 %v910, 1.442695
        %v988 = vpow.pop %v987
        %v989 = vmul.f32 %v911, 1.442695
        %v990 = vpow.pop %v989
        %v991 = vmul.f32 %v912, 1.442695
        %v992 = vpow.pop %v991
        %v993 = vmul.f32 %v913, 1.442695
        %v994 = vpow.pop %v993
        %v995 = vmul.f32 %v914, 1.442695
        %v996 = vpow.pop %v995
        %v997 = vmul.f32 %v915, 1.442695
        %v998 = vpow.pop %v997
        %v999 = vmul.f32 %v916, 1.442695
        %v1000 = vpow.pop %v999
        %v1001 = vmul.f32 %v917, 1.442695
        %v1002 = vpow.pop %v1001
        %v1003 = vmul.f32 %v918, 1.442695
        %v1004 = vpow.pop %v1003
        %v1005 = vmul.f32 %v919, 1.442695
        %v1006 = vpow.pop %v1005
        %v1007 = vmul.f32 %v920, 1.442695
        %v1008 = vpow.pop %v1007
        %v1009 = vmul.f32 %v921, 1.442695
        %v1010 = vpow.pop %v1009
        %v1011 = vmul.f32 %v922, 1.442695
        %v1012 = vpow.pop %v1011
        %v1013 = vmul.f32 %v923, 1.442695
        %v1014 = vpow.pop %v1013
        %v1015 = vmul.f32 %v924, 1.442695
        %v1016 = vpow.pop %v1015
        %v1017 = vmul.f32 %v925, 1.442695
        %v1018 = vpow.pop %v1017
        %v1019 = vmul.f32 %v926, 1.442695
        %v1020 = vpow.pop %v1019
        %v1021 = vmul.f32 %v927, 1.442695
        %v1022 = vpow.pop %v1021
        %v1023 = vmul.f32 %v928, 1.442695
        %v1024 = vpow.pop %v1023
        %v1025 = vmul.f32 %v929, 1.442695
        %v1026 = vpow.pop %v1025
        %v1027 = vmul.f32 %v930, 1.442695
        %v1028 = vpow.pop %v1027
        %v1029 = vmul.f32 %v931, 1.442695
        %v1030 = vpow.pop %v1029
        %v1031 = vmul.f32 %v932, 1.442695
        %v1032 = vpow.pop %v1031
        %v1033 = vmul.f32 %v933, 1.442695
        %v1034 = vpow.pop %v1033
        %v1035 = vmul.f32 %v934, 1.442695
        %v1036 = vpow.pop %v1035
        %v1037 = vmul.f32 %v935, 1.442695
        %v1038 = vpow.pop %v1037
        %v1039 = vmul.f32 %v936, 1.442695
        %v1040 = vpow.pop %v1039
        %v1041 = vmul.f32 %v937, 1.442695
        %v1042 = vpow.pop %v1041
        %v1043 = vmul.f32 %v938, 1.442695
        %v1044 = vpow.pop %v1043
        %v1045 = vmul.f32 %v939, 1.442695
        %v1046 = vpow.pop %v1045
        %v1047 = vmul.f32 %v940, 1.442695
        %v1048 = vpow.pop %v1047
        %v1049 = vmul.f32 %v941, 1.442695
        %v1050 = vpow.pop %v1049
        %v1051 = vmul.f32 %v942, 1.442695
        %v1052 = vpow.pop %v1051
        %v1053 = vmul.f32 %v943, 1.442695
        %v1054 = vpow.pop %v1053
        %v1055 = vmul.f32 %v944, 1.442695
        %v1056 = vpow.pop %v1055
        %v1057 = vmul.f32 %v945, 1.442695
        %v1058 = vpow.pop %v1057
        %v1059 = vmul.f32 %v946, 1.442695
        %v1060 = vpow.pop %v1059
        %v1061 = vmul.f32 %v947, 1.442695
        %v1062 = vpow.pop %v1061
        %v1063 = vmul.f32 %v948, 1.442695
        %v1064 = vpow.pop %v1063
        %v1065 = vmul.f32 %v949, 1.442695
        %v1066 = vpow.pop %v1065
        %v1067 = vmul.f32 %v950, 1.442695
        %v1068 = vpow.pop %v1067
        %v1069 = vmul.f32 %v951, 1.442695
        %v1070 = vpow.pop %v1069
        %v1071 = vmul.f32 %v952, 1.442695
        %v1072 = vpow.pop %v1071
        %v1073 = vmul.f32 %v953, 1.442695
        %v1074 = vpow.pop %v1073
        %v1075 = vmul.f32 %v954, 1.442695
        %v1076 = vpow.pop %v1075
        %v1077 = vmul.f32 %v955, 1.442695
        %v1078 = vpow.pop %v1077
        %v1079 = vmul.f32 %v956, 1.442695
        %v1080 = vpow.pop %v1079
        %v1081 = vmul.f32 %v957, 1.442695
        %v1082 = vpow.pop %v1081
        %v1083 = vmul.f32 %v958, 1.442695
        %v1084 = vpow.pop %v1083
        %v1085 = vmul.f32 %v959, 1.442695
        %v1086 = vpow.pop %v1085
        %v1087 = vmul.f32 %v960, 1.442695
        %v1088 = vpow.pop %v1087
        %v1089 = vadd.f32 %v962, 1.0
        %v1090 = vadd.f32 %v964, 1.0
        %v1091 = vadd.f32 %v966, 1.0
        %v1092 = vadd.f32 %v968, 1.0
        %v1093 = vadd.f32 %v970, 1.0
        %v1094 = vadd.f32 %v972, 1.0
        %v1095 = vadd.f32 %v974, 1.0
        %v1096 = vadd.f32 %v976, 1.0
        %v1097 = vadd.f32 %v978, 1.0
        %v1098 = vadd.f32 %v980, 1.0
        %v1099 = vadd.f32 %v982, 1.0
        %v1100 = vadd.f32 %v984, 1.0
        %v1101 = vadd.f32 %v986, 1.0
        %v1102 = vadd.f32 %v988, 1.0
        %v1103 = vadd.f32 %v990, 1.0
        %v1104 = vadd.f32 %v992, 1.0
        %v1105 = vadd.f32 %v994, 1.0
        %v1106 = vadd.f32 %v996, 1.0
        %v1107 = vadd.f32 %v998, 1.0
        %v1108 = vadd.f32 %v1000, 1.0
        %v1109 = vadd.f32 %v1002, 1.0
        %v1110 = vadd.f32 %v1004, 1.0
        %v1111 = vadd.f32 %v1006, 1.0
        %v1112 = vadd.f32 %v1008, 1.0
        %v1113 = vadd.f32 %v1010, 1.0
        %v1114 = vadd.f32 %v1012, 1.0
        %v1115 = vadd.f32 %v1014, 1.0
        %v1116 = vadd.f32 %v1016, 1.0
        %v1117 = vadd.f32 %v1018, 1.0
        %v1118 = vadd.f32 %v1020, 1.0
        %v1119 = vadd.f32 %v1022, 1.0
        %v1120 = vadd.f32 %v1024, 1.0
        %v1121 = vadd.f32 %v1026, 1.0
        %v1122 = vadd.f32 %v1028, 1.0
        %v1123 = vadd.f32 %v1030, 1.0
        %v1124 = vadd.f32 %v1032, 1.0
        %v1125 = vadd.f32 %v1034, 1.0
        %v1126 = vadd.f32 %v1036, 1.0
        %v1127 = vadd.f32 %v1038, 1.0
        %v1128 = vadd.f32 %v1040, 1.0
        %v1129 = vadd.f32 %v1042, 1.0
        %v1130 = vadd.f32 %v1044, 1.0
        %v1131 = vadd.f32 %v1046, 1.0
        %v1132 = vadd.f32 %v1048, 1.0
        %v1133 = vadd.f32 %v1050, 1.0
        %v1134 = vadd.f32 %v1052, 1.0
        %v1135 = vadd.f32 %v1054, 1.0
        %v1136 = vadd.f32 %v1056, 1.0
        %v1137 = vadd.f32 %v1058, 1.0
        %v1138 = vadd.f32 %v1060, 1.0
        %v1139 = vadd.f32 %v1062, 1.0
        %v1140 = vadd.f32 %v1064, 1.0
        %v1141 = vadd.f32 %v1066, 1.0
        %v1142 = vadd.f32 %v1068, 1.0
        %v1143 = vadd.f32 %v1070, 1.0
        %v1144 = vadd.f32 %v1072, 1.0
        %v1145 = vadd.f32 %v1074, 1.0
        %v1146 = vadd.f32 %v1076, 1.0
        %v1147 = vadd.f32 %v1078, 1.0
        %v1148 = vadd.f32 %v1080, 1.0
        %v1149 = vadd.f32 %v1082, 1.0
        %v1150 = vadd.f32 %v1084, 1.0
        %v1151 = vadd.f32 %v1086, 1.0
        %v1152 = vadd.f32 %v1088, 1.0
        %v1153 = vrcp.pop %v1089
        %v1154 = vmul.f32 1.0, %v1153
        %v1155 = vrcp.pop %v1090
        %v1156 = vmul.f32 1.0, %v1155
        %v1157 = vrcp.pop %v1091
        %v1158 = vmul.f32 1.0, %v1157
        %v1159 = vrcp.pop %v1092
        %v1160 = vmul.f32 1.0, %v1159
        %v1161 = vrcp.pop %v1093
        %v1162 = vmul.f32 1.0, %v1161
        %v1163 = vrcp.pop %v1094
        %v1164 = vmul.f32 1.0, %v1163
        %v1165 = vrcp.pop %v1095
        %v1166 = vmul.f32 1.0, %v1165
        %v1167 = vrcp.pop %v1096
        %v1168 = vmul.f32 1.0, %v1167
        %v1169 = vrcp.pop %v1097
        %v1170 = vmul.f32 1.0, %v1169
        %v1171 = vrcp.pop %v1098
        %v1172 = vmul.f32 1.0, %v1171
        %v1173 = vrcp.pop %v1099
        %v1174 = vmul.f32 1.0, %v1173
        %v1175 = vrcp.pop %v1100
        %v1176 = vmul.f32 1.0, %v1175
        %v1177 = vrcp.pop %v1101
        %v1178 = vmul.f32 1.0, %v1177
        %v1179 = vrcp.pop %v1102
        %v1180 = vmul.f32 1.0, %v1179
        %v1181 = vrcp.pop %v1103
        %v1182 = vmul.f32 1.0, %v1181
        %v1183 = vrcp.pop %v1104
        %v1184 = vmul.f32 1.0, %v1183
        %v1185 = vrcp.pop %v1105
        %v1186 = vmul.f32 1.0, %v1185
        %v1187 = vrcp.pop %v1106
        %v1188 = vmul.f32 1.0, %v1187
        %v1189 = vrcp.pop %v1107
        %v1190 = vmul.f32 1.0, %v1189
        %v1191 = vrcp.pop %v1108
        %v1192 = vmul.f32 1.0, %v1191
        %v1193 = vrcp.pop %v1109
        %v1194 = vmul.f32 1.0, %v1193
        %v1195 = vrcp.pop %v1110
        %v1196 = vmul.f32 1.0, %v1195
        %v1197 = vrcp.pop %v1111
        %v1198 = vmul.f32 1.0, %v1197
        %v1199 = vrcp.pop %v1112
        %v1200 = vmul.f32 1.0, %v1199
        %v1201 = vrcp.pop %v1113
        %v1202 = vmul.f32 1.0, %v1201
        %v1203 = vrcp.pop %v1114
        %v1204 = vmul.f32 1.0, %v1203
        %v1205 = vrcp.pop %v1115
        %v1206 = vmul.f32 1.0, %v1205
        %v1207 = vrcp.pop %v1116
        %v1208 = vmul.f32 1.0, %v1207
        %v1209 = vrcp.pop %v1117
        %v1210 = vmul.f32 1.0, %v1209
        %v1211 = vrcp.pop %v1118
        %v1212 = vmul.f32 1.0, %v1211
        %v1213 = vrcp.pop %v1119
        %v1214 = vmul.f32 1.0, %v1213
        %v1215 = vrcp.pop %v1120
        %v1216 = vmul.f32 1.0, %v1215
        %v1217 = vrcp.pop %v1121
        %v1218 = vmul.f32 1.0, %v1217
        %v1219 = vrcp.pop %v1122
        %v1220 = vmul.f32 1.0, %v1219
        %v1221 = vrcp.pop %v1123
        %v1222 = vmul.f32 1.0, %v1221
        %v1223 = vrcp.pop %v1124
        %v1224 = vmul.f32 1.0, %v1223
        %v1225 = vrcp.pop %v1125
        %v1226 = vmul.f32 1.0, %v1225
        %v1227 = vrcp.pop %v1126
        %v1228 = vmul.f32 1.0, %v1227
        %v1229 = vrcp.pop %v1127
        %v1230 = vmul.f32 1.0, %v1229
        %v1231 = vrcp.pop %v1128
        %v1232 = vmul.f32 1.0, %v1231
        %v1233 = vrcp.pop %v1129
        %v1234 = vmul.f32 1.0, %v1233
        %v1235 = vrcp.pop %v1130
        %v1236 = vmul.f32 1.0, %v1235
        %v1237 = vrcp.pop %v1131
        %v1238 = vmul.f32 1.0, %v1237
        %v1239 = vrcp.pop %v1132
        %v1240 = vmul.f32 1.0, %v1239
        %v1241 = vrcp.pop %v1133
        %v1242 = vmul.f32 1.0, %v1241
        %v1243 = vrcp.pop %v1134
        %v1244 = vmul.f32 1.0, %v1243
        %v1245 = vrcp.pop %v1135
        %v1246 = vmul.f32 1.0, %v1245
        %v1247 = vrcp.pop %v1136
        %v1248 = vmul.f32 1.0, %v1247
        %v1249 = vrcp.pop %v1137
        %v1250 = vmul.f32 1.0, %v1249
        %v1251 = vrcp.pop %v1138
        %v1252 = vmul.f32 1.0, %v1251
        %v1253 = vrcp.pop %v1139
        %v1254 = vmul.f32 1.0, %v1253
        %v1255 = vrcp.pop %v1140
        %v1256 = vmul.f32 1.0, %v1255
        %v1257 = vrcp.pop %v1141
        %v1258 = vmul.f32 1.0, %v1257
        %v1259 = vrcp.pop %v1142
        %v1260 = vmul.f32 1.0, %v1259
        %v1261 = vrcp.pop %v1143
        %v1262 = vmul.f32 1.0, %v1261
        %v1263 = vrcp.pop %v1144
        %v1264 = vmul.f32 1.0, %v1263
        %v1265 = vrcp.pop %v1145
        %v1266 = vmul.f32 1.0, %v1265
        %v1267 = vrcp.pop %v1146
        %v1268 = vmul.f32 1.0, %v1267
        %v1269 = vrcp.pop %v1147
        %v1270 = vmul.f32 1.0, %v1269
        %v1271 = vrcp.pop %v1148
        %v1272 = vmul.f32 1.0, %v1271
        %v1273 = vrcp.pop %v1149
        %v1274 = vmul.f32 1.0, %v1273
        %v1275 = vrcp.pop %v1150
        %v1276 = vmul.f32 1.0, %v1275
        %v1277 = vrcp.pop %v1151
        %v1278 = vmul.f32 1.0, %v1277
        %v1279 = vrcp.pop %v1152
        %v1280 = vmul.f32 1.0, %v1279
        %v1281 = vmul.f32 %v1154, %v479
        %v1282 = vmul.f32 %v1156, %v480
        %v1283 = vmul.f32 %v1158, %v481
        %v1284 = vmul.f32 %v1160, %v482
        %v1285 = vmul.f32 %v1162, %v483
        %v1286 = vmul.f32 %v1164, %v484
        %v1287 = vmul.f32 %v1166, %v485
        %v1288 = vmul.f32 %v1168, %v486
        %v1289 = vmul.f32 %v1170, %v487
        %v1290 = vmul.f32 %v1172, %v488
        %v1291 = vmul.f32 %v1174, %v489
        %v1292 = vmul.f32 %v1176, %v490
        %v1293 = vmul.f32 %v1178, %v491
        %v1294 = vmul.f32 %v1180, %v492
        %v1295 = vmul.f32 %v1182, %v493
        %v1296 = vmul.f32 %v1184, %v494
        %v1297 = vmul.f32 %v1186, %v495
        %v1298 = vmul.f32 %v1188, %v496
        %v1299 = vmul.f32 %v1190, %v497
        %v1300 = vmul.f32 %v1192, %v498
        %v1301 = vmul.f32 %v1194, %v499
        %v1302 = vmul.f32 %v1196, %v500
        %v1303 = vmul.f32 %v1198, %v501
        %v1304 = vmul.f32 %v1200, %v502
        %v1305 = vmul.f32 %v1202, %v503
        %v1306 = vmul.f32 %v1204, %v504
        %v1307 = vmul.f32 %v1206, %v505
        %v1308 = vmul.f32 %v1208, %v506
        %v1309 = vmul.f32 %v1210, %v507
        %v1310 = vmul.f32 %v1212, %v508
        %v1311 = vmul.f32 %v1214, %v509
        %v1312 = vmul.f32 %v1216, %v510
        %v1313 = vmul.f32 %v1218, %v511
        %v1314 = vmul.f32 %v1220, %v512
        %v1315 = vmul.f32 %v1222, %v513
        %v1316 = vmul.f32 %v1224, %v514
        %v1317 = vmul.f32 %v1226, %v515
        %v1318 = vmul.f32 %v1228, %v516
        %v1319 = vmul.f32 %v1230, %v517
        %v1320 = vmul.f32 %v1232, %v518
        %v1321 = vmul.f32 %v1234, %v519
        %v1322 = vmul.f32 %v1236, %v520
        %v1323 = vmul.f32 %v1238, %v521
        %v1324 = vmul.f32 %v1240, %v522
        %v1325 = vmul.f32 %v1242, %v523
        %v1326 = vmul.f32 %v1244, %v524
        %v1327 = vmul.f32 %v1246, %v525
        %v1328 = vmul.f32 %v1248, %v526
        %v1329 = vmul.f32 %v1250, %v527
        %v1330 = vmul.f32 %v1252, %v528
        %v1331 = vmul.f32 %v1254, %v529
        %v1332 = vmul.f32 %v1256, %v530
        %v1333 = vmul.f32 %v1258, %v531
        %v1334 = vmul.f32 %v1260, %v532
        %v1335 = vmul.f32 %v1262, %v533
        %v1336 = vmul.f32 %v1264, %v534
        %v1337 = vmul.f32 %v1266, %v535
        %v1338 = vmul.f32 %v1268, %v536
        %v1339 = vmul.f32 %v1270, %v537
        %v1340 = vmul.f32 %v1272, %v538
        %v1341 = vmul.f32 %v1274, %v539
        %v1342 = vmul.f32 %v1276, %v540
        %v1343 = vmul.f32 %v1278, %v541
        %v1344 = vmul.f32 %v1280, %v542
        %1345 = vst [vmem:[%s472] sm:$0xff] %v1281
        %1346 = vst [vmem:[%s472 + $0x8] sm:$0xff] %v1282
        %1347 = vst [vmem:[%s472 + $0x10] sm:$0xff] %v1283
        %1348 = vst [vmem:[%s472 + $0x18] sm:$0xff] %v1284
        %1349 = vst [vmem:[%s472 + $0x20] sm:$0xff] %v1285
        %1350 = vst [vmem:[%s472 + $0x28] sm:$0xff] %v1286
        %1351 = vst [vmem:[%s472 + $0x30] sm:$0xff] %v1287
        %1352 = vst [vmem:[%s472 + $0x38] sm:$0xff] %v1288
        %1353 = vst [vmem:[%s472 + $0x40] sm:$0xff] %v1289
        %1354 = vst [vmem:[%s472 + $0x48] sm:$0xff] %v1290
        %1355 = vst [vmem:[%s472 + $0x50] sm:$0xff] %v1291
        %1356 = vst [vmem:[%s472 + $0x58] sm:$0xff] %v1292
        %1357 = vst [vmem:[%s472 + $0x60] sm:$0xff] %v1293
        %1358 = vst [vmem:[%s472 + $0x68] sm:$0xff] %v1294
        %1359 = vst [vmem:[%s472 + $0x70] sm:$0xff] %v1295
        %1360 = vst [vmem:[%s472 + $0x78] sm:$0xff] %v1296
        %1361 = vst [vmem:[%s472 + $0x80] sm:$0xff] %v1297
        %1362 = vst [vmem:[%s472 + $0x88] sm:$0xff] %v1298
        %1363 = vst [vmem:[%s472 + $0x90] sm:$0xff] %v1299
        %1364 = vst [vmem:[%s472 + $0x98] sm:$0xff] %v1300
        %1365 = vst [vmem:[%s472 + $0xa0] sm:$0xff] %v1301
        %1366 = vst [vmem:[%s472 + $0xa8] sm:$0xff] %v1302
        %1367 = vst [vmem:[%s472 + $0xb0] sm:$0xff] %v1303
        %1368 = vst [vmem:[%s472 + $0xb8] sm:$0xff] %v1304
        %1369 = vst [vmem:[%s472 + $0xc0] sm:$0xff] %v1305
        %1370 = vst [vmem:[%s472 + $0xc8] sm:$0xff] %v1306
        %1371 = vst [vmem:[%s472 + $0xd0] sm:$0xff] %v1307
        %1372 = vst [vmem:[%s472 + $0xd8] sm:$0xff] %v1308
        %1373 = vst [vmem:[%s472 + $0xe0] sm:$0xff] %v1309
        %1374 = vst [vmem:[%s472 + $0xe8] sm:$0xff] %v1310
        %1375 = vst [vmem:[%s472 + $0xf0] sm:$0xff] %v1311
        %1376 = vst [vmem:[%s472 + $0xf8] sm:$0xff] %v1312
        %1377 = vst [vmem:[%s472 + $0x100] sm:$0xff] %v1313
        %1378 = vst [vmem:[%s472 + $0x108] sm:$0xff] %v1314
        %1379 = vst [vmem:[%s472 + $0x110] sm:$0xff] %v1315
        %1380 = vst [vmem:[%s472 + $0x118] sm:$0xff] %v1316
        %1381 = vst [vmem:[%s472 + $0x120] sm:$0xff] %v1317
        %1382 = vst [vmem:[%s472 + $0x128] sm:$0xff] %v1318
        %1383 = vst [vmem:[%s472 + $0x130] sm:$0xff] %v1319
        %1384 = vst [vmem:[%s472 + $0x138] sm:$0xff] %v1320
        %1385 = vst [vmem:[%s472 + $0x140] sm:$0xff] %v1321
        %1386 = vst [vmem:[%s472 + $0x148] sm:$0xff] %v1322
        %1387 = vst [vmem:[%s472 + $0x150] sm:$0xff] %v1323
        %1388 = vst [vmem:[%s472 + $0x158] sm:$0xff] %v1324
        %1389 = vst [vmem:[%s472 + $0x160] sm:$0xff] %v1325
        %1390 = vst [vmem:[%s472 + $0x168] sm:$0xff] %v1326
        %1391 = vst [vmem:[%s472 + $0x170] sm:$0xff] %v1327
        %1392 = vst [vmem:[%s472 + $0x178] sm:$0xff] %v1328
        %1393 = vst [vmem:[%s472 + $0x180] sm:$0xff] %v1329
        %1394 = vst [vmem:[%s472 + $0x188] sm:$0xff] %v1330
        %1395 = vst [vmem:[%s472 + $0x190] sm:$0xff] %v1331
        %1396 = vst [vmem:[%s472 + $0x198] sm:$0xff] %v1332
        %1397 = vst [vmem:[%s472 + $0x1a0] sm:$0xff] %v1333
        %1398 = vst [vmem:[%s472 + $0x1a8] sm:$0xff] %v1334
        %1399 = vst [vmem:[%s472 + $0x1b0] sm:$0xff] %v1335
        %1400 = vst [vmem:[%s472 + $0x1b8] sm:$0xff] %v1336
        %1401 = vst [vmem:[%s472 + $0x1c0] sm:$0xff] %v1337
        %1402 = vst [vmem:[%s472 + $0x1c8] sm:$0xff] %v1338
        %1403 = vst [vmem:[%s472 + $0x1d0] sm:$0xff] %v1339
        %1404 = vst [vmem:[%s472 + $0x1d8] sm:$0xff] %v1340
        %1405 = vst [vmem:[%s472 + $0x1e0] sm:$0xff] %v1341
        %1406 = vst [vmem:[%s472 + $0x1e8] sm:$0xff] %v1342
        %1407 = vst [vmem:[%s472 + $0x1f0] sm:$0xff] %v1343
        %1408 = vst [vmem:[%s472 + $0x1f8] sm:$0xff] %v1344
        %s1409 = sand.u32 %s100, 1
        %s1410 = sand.u32 %s100, 1
        %s1411 = smul.addr %s1410, 512
        %s1412 = scalar_lea.vmem [#allocation3], %s1411
        // Predicated region
        $region71: #{spatial_att.1} parent=65 // pred_check
          %p1413 = pneg %p110
        $region72: #{spatial_att.1} parent=65 // pred_check_branch
          %1415 = sbr.rel (%p1413) target = $region74
        $region73: #{spatial_att.1} parent=65 // pred_region
          %s1416 = smul.addr %s14, 8
          %s1417 = scalar_lea.vmem %s3, %s1416
          // Predicated region
          $region75: #{spatial_att.1} parent=73 // pred_check
            _
          $region76: #{spatial_att.1} parent=73 // pred_check_branch
            %1419 = sbr.rel (0) target = $region78
          $region77: #{spatial_att.1} parent=73 // pred_region
            // Predicated region
            $region79: #{spatial_att.1} parent=77 // pred_check
              _
            $region80: #{spatial_att.1} parent=77 // pred_check_branch
              %1421 = sbr.rel (0) target = $region82
            $region81: #{spatial_att.1} parent=77 // pred_region
              // Predicated region
              $region94: #{spatial_att.1} parent=81 // pred_check
                _
              $region95: #{spatial_att.1} parent=81 // pred_check_branch
                %1562 = sbr.rel (0) target = $region97
              $region96: #{spatial_att.1} parent=81 // pred_region
                loop: start=0, step=1, limit=1
                $region98: #{spatial_att.1} parent=96 // loop_pre_header
                  _
                $region99: #{spatial_att.1} parent=96 // loop_header
                  %s1564 = sphi 0, %s1568
                  %p1565 = scmp.ge.s32.totalorder %s1564, 1
                  %s1569 = sphi %s1412, %s1412
                  %s1570 = sphi %s1417, %s1417
                $region100: #{spatial_att.1} parent=96 // loop_header_branch
                  %1567 = sbr.rel (%p1565) target = $region104
                $region101: #{spatial_att.1} parent=96 // loop_body
                  %v1571 = vld [vmem:[%s1569] sm:$0xff]
                  %1572 = vst [vmem:[%s1570] sm:$0xff] %v1571
                  %v1573 = vld [vmem:[%s1569 + $0x8] sm:$0xff]
                  %1574 = vst [vmem:[%s1570 + $0x10] sm:$0xff] %v1573
                  %v1575 = vld [vmem:[%s1569 + $0x10] sm:$0xff]
                  %1576 = vst [vmem:[%s1570 + $0x20] sm:$0xff] %v1575
                  %v1577 = vld [vmem:[%s1569 + $0x18] sm:$0xff]
                  %1578 = vst [vmem:[%s1570 + $0x30] sm:$0xff] %v1577
                  %v1579 = vld [vmem:[%s1569 + $0x20] sm:$0xff]
                  %1580 = vst [vmem:[%s1570 + $0x40] sm:$0xff] %v1579
                  %v1581 = vld [vmem:[%s1569 + $0x28] sm:$0xff]
                  %1582 = vst [vmem:[%s1570 + $0x50] sm:$0xff] %v1581
                  %v1583 = vld [vmem:[%s1569 + $0x30] sm:$0xff]
                  %1584 = vst [vmem:[%s1570 + $0x60] sm:$0xff] %v1583
                  %v1585 = vld [vmem:[%s1569 + $0x38] sm:$0xff]
                  %1586 = vst [vmem:[%s1570 + $0x70] sm:$0xff] %v1585
                  %v1587 = vld [vmem:[%s1569 + $0x40] sm:$0xff]
                  %1588 = vst [vmem:[%s1570 + $0x80] sm:$0xff] %v1587
                  %v1589 = vld [vmem:[%s1569 + $0x48] sm:$0xff]
                  %1590 = vst [vmem:[%s1570 + $0x90] sm:$0xff] %v1589
                  %v1591 = vld [vmem:[%s1569 + $0x50] sm:$0xff]
                  %1592 = vst [vmem:[%s1570 + $0xa0] sm:$0xff] %v1591
                  %v1593 = vld [vmem:[%s1569 + $0x58] sm:$0xff]
                  %1594 = vst [vmem:[%s1570 + $0xb0] sm:$0xff] %v1593
                  %v1595 = vld [vmem:[%s1569 + $0x60] sm:$0xff]
                  %1596 = vst [vmem:[%s1570 + $0xc0] sm:$0xff] %v1595
                  %v1597 = vld [vmem:[%s1569 + $0x68] sm:$0xff]
                  %1598 = vst [vmem:[%s1570 + $0xd0] sm:$0xff] %v1597
                  %v1599 = vld [vmem:[%s1569 + $0x70] sm:$0xff]
                  %1600 = vst [vmem:[%s1570 + $0xe0] sm:$0xff] %v1599
                  %v1601 = vld [vmem:[%s1569 + $0x78] sm:$0xff]
                  %1602 = vst [vmem:[%s1570 + $0xf0] sm:$0xff] %v1601
                  %v1603 = vld [vmem:[%s1569 + $0x80] sm:$0xff]
                  %1604 = vst [vmem:[%s1570 + $0x100] sm:$0xff] %v1603
                  %v1605 = vld [vmem:[%s1569 + $0x88] sm:$0xff]
                  %1606 = vst [vmem:[%s1570 + $0x110] sm:$0xff] %v1605
                  %v1607 = vld [vmem:[%s1569 + $0x90] sm:$0xff]
                  %1608 = vst [vmem:[%s1570 + $0x120] sm:$0xff] %v1607
                  %v1609 = vld [vmem:[%s1569 + $0x98] sm:$0xff]
                  %1610 = vst [vmem:[%s1570 + $0x130] sm:$0xff] %v1609
                  %v1611 = vld [vmem:[%s1569 + $0xa0] sm:$0xff]
                  %1612 = vst [vmem:[%s1570 + $0x140] sm:$0xff] %v1611
                  %v1613 = vld [vmem:[%s1569 + $0xa8] sm:$0xff]
                  %1614 = vst [vmem:[%s1570 + $0x150] sm:$0xff] %v1613
                  %v1615 = vld [vmem:[%s1569 + $0xb0] sm:$0xff]
                  %1616 = vst [vmem:[%s1570 + $0x160] sm:$0xff] %v1615
                  %v1617 = vld [vmem:[%s1569 + $0xb8] sm:$0xff]
                  %1618 = vst [vmem:[%s1570 + $0x170] sm:$0xff] %v1617
                  %v1619 = vld [vmem:[%s1569 + $0xc0] sm:$0xff]
                  %1620 = vst [vmem:[%s1570 + $0x180] sm:$0xff] %v1619
                  %v1621 = vld [vmem:[%s1569 + $0xc8] sm:$0xff]
                  %1622 = vst [vmem:[%s1570 + $0x190] sm:$0xff] %v1621
                  %v1623 = vld [vmem:[%s1569 + $0xd0] sm:$0xff]
                  %1624 = vst [vmem:[%s1570 + $0x1a0] sm:$0xff] %v1623
                  %v1625 = vld [vmem:[%s1569 + $0xd8] sm:$0xff]
                  %1626 = vst [vmem:[%s1570 + $0x1b0] sm:$0xff] %v1625
                  %v1627 = vld [vmem:[%s1569 + $0xe0] sm:$0xff]
                  %1628 = vst [vmem:[%s1570 + $0x1c0] sm:$0xff] %v1627
                  %v1629 = vld [vmem:[%s1569 + $0xe8] sm:$0xff]
                  %1630 = vst [vmem:[%s1570 + $0x1d0] sm:$0xff] %v1629
                  %v1631 = vld [vmem:[%s1569 + $0xf0] sm:$0xff]
                  %1632 = vst [vmem:[%s1570 + $0x1e0] sm:$0xff] %v1631
                  %v1633 = vld [vmem:[%s1569 + $0xf8] sm:$0xff]
                  %1634 = vst [vmem:[%s1570 + $0x1f0] sm:$0xff] %v1633
                  %v1635 = vld [vmem:[%s1569 + $0x100] sm:$0xff]
                  %1636 = vst [vmem:[%s1570 + $0x200] sm:$0xff] %v1635
                  %v1637 = vld [vmem:[%s1569 + $0x108] sm:$0xff]
                  %1638 = vst [vmem:[%s1570 + $0x210] sm:$0xff] %v1637
                  %v1639 = vld [vmem:[%s1569 + $0x110] sm:$0xff]
                  %1640 = vst [vmem:[%s1570 + $0x220] sm:$0xff] %v1639
                  %v1641 = vld [vmem:[%s1569 + $0x118] sm:$0xff]
                  %1642 = vst [vmem:[%s1570 + $0x230] sm:$0xff] %v1641
                  %v1643 = vld [vmem:[%s1569 + $0x120] sm:$0xff]
                  %1644 = vst [vmem:[%s1570 + $0x240] sm:$0xff] %v1643
                  %v1645 = vld [vmem:[%s1569 + $0x128] sm:$0xff]
                  %1646 = vst [vmem:[%s1570 + $0x250] sm:$0xff] %v1645
                  %v1647 = vld [vmem:[%s1569 + $0x130] sm:$0xff]
                  %1648 = vst [vmem:[%s1570 + $0x260] sm:$0xff] %v1647
                  %v1649 = vld [vmem:[%s1569 + $0x138] sm:$0xff]
                  %1650 = vst [vmem:[%s1570 + $0x270] sm:$0xff] %v1649
                  %v1651 = vld [vmem:[%s1569 + $0x140] sm:$0xff]
                  %1652 = vst [vmem:[%s1570 + $0x280] sm:$0xff] %v1651
                  %v1653 = vld [vmem:[%s1569 + $0x148] sm:$0xff]
                  %1654 = vst [vmem:[%s1570 + $0x290] sm:$0xff] %v1653
                  %v1655 = vld [vmem:[%s1569 + $0x150] sm:$0xff]
                  %1656 = vst [vmem:[%s1570 + $0x2a0] sm:$0xff] %v1655
                  %v1657 = vld [vmem:[%s1569 + $0x158] sm:$0xff]
                  %1658 = vst [vmem:[%s1570 + $0x2b0] sm:$0xff] %v1657
                  %v1659 = vld [vmem:[%s1569 + $0x160] sm:$0xff]
                  %1660 = vst [vmem:[%s1570 + $0x2c0] sm:$0xff] %v1659
                  %v1661 = vld [vmem:[%s1569 + $0x168] sm:$0xff]
                  %1662 = vst [vmem:[%s1570 + $0x2d0] sm:$0xff] %v1661
                  %v1663 = vld [vmem:[%s1569 + $0x170] sm:$0xff]
                  %1664 = vst [vmem:[%s1570 + $0x2e0] sm:$0xff] %v1663
                  %v1665 = vld [vmem:[%s1569 + $0x178] sm:$0xff]
                  %1666 = vst [vmem:[%s1570 + $0x2f0] sm:$0xff] %v1665
                  %v1667 = vld [vmem:[%s1569 + $0x180] sm:$0xff]
                  %1668 = vst [vmem:[%s1570 + $0x300] sm:$0xff] %v1667
                  %v1669 = vld [vmem:[%s1569 + $0x188] sm:$0xff]
                  %1670 = vst [vmem:[%s1570 + $0x310] sm:$0xff] %v1669
                  %v1671 = vld [vmem:[%s1569 + $0x190] sm:$0xff]
                  %1672 = vst [vmem:[%s1570 + $0x320] sm:$0xff] %v1671
                  %v1673 = vld [vmem:[%s1569 + $0x198] sm:$0xff]
                  %1674 = vst [vmem:[%s1570 + $0x330] sm:$0xff] %v1673
                  %v1675 = vld [vmem:[%s1569 + $0x1a0] sm:$0xff]
                  %1676 = vst [vmem:[%s1570 + $0x340] sm:$0xff] %v1675
                  %v1677 = vld [vmem:[%s1569 + $0x1a8] sm:$0xff]
                  %1678 = vst [vmem:[%s1570 + $0x350] sm:$0xff] %v1677
                  %v1679 = vld [vmem:[%s1569 + $0x1b0] sm:$0xff]
                  %1680 = vst [vmem:[%s1570 + $0x360] sm:$0xff] %v1679
                  %v1681 = vld [vmem:[%s1569 + $0x1b8] sm:$0xff]
                  %1682 = vst [vmem:[%s1570 + $0x370] sm:$0xff] %v1681
                  %v1683 = vld [vmem:[%s1569 + $0x1c0] sm:$0xff]
                  %1684 = vst [vmem:[%s1570 + $0x380] sm:$0xff] %v1683
                  %v1685 = vld [vmem:[%s1569 + $0x1c8] sm:$0xff]
                  %1686 = vst [vmem:[%s1570 + $0x390] sm:$0xff] %v1685
                  %v1687 = vld [vmem:[%s1569 + $0x1d0] sm:$0xff]
                  %1688 = vst [vmem:[%s1570 + $0x3a0] sm:$0xff] %v1687
                  %v1689 = vld [vmem:[%s1569 + $0x1d8] sm:$0xff]
                  %1690 = vst [vmem:[%s1570 + $0x3b0] sm:$0xff] %v1689
                  %v1691 = vld [vmem:[%s1569 + $0x1e0] sm:$0xff]
                  %1692 = vst [vmem:[%s1570 + $0x3c0] sm:$0xff] %v1691
                  %v1693 = vld [vmem:[%s1569 + $0x1e8] sm:$0xff]
                  %1694 = vst [vmem:[%s1570 + $0x3d0] sm:$0xff] %v1693
                  %v1695 = vld [vmem:[%s1569 + $0x1f0] sm:$0xff]
                  %1696 = vst [vmem:[%s1570 + $0x3e0] sm:$0xff] %v1695
                  %v1697 = vld [vmem:[%s1569 + $0x1f8] sm:$0xff]
                  %1698 = vst [vmem:[%s1570 + $0x3f0] sm:$0xff] %v1697
                $region102: #{spatial_att.1} parent=96 // loop_footer
                  %s1568 = sadd.s32 1, %s1564
                $region103: #{spatial_att.1} parent=96 // loop_footer_branch
                  %1563 = sbr.rel target = $region99
                $region104: #{spatial_att.1} parent=96 // loop_exit
                  _
              $region97: #{spatial_att.1} parent=81 // pred_fallthru
                _
              // Predicated region
              $region105: #{spatial_att.1} parent=81 // pred_check
                _
              $region106: #{spatial_att.1} parent=81 // pred_check_branch
                %1700 = sbr.rel target = $region108
              $region107: #{spatial_att.1} parent=81 // pred_region
                _
              $region108: #{spatial_att.1} parent=81 // pred_fallthru
                _
            $region82: #{spatial_att.1} parent=77 // pred_fallthru
              _
            // Predicated region
            $region83: #{spatial_att.1} parent=77 // pred_check
              _
            $region84: #{spatial_att.1} parent=77 // pred_check_branch
              %1423 = sbr.rel target = $region86
            $region85: #{spatial_att.1} parent=77 // pred_region
              loop: start=0, step=1, limit=1
              $region87: #{spatial_att.1} parent=85 // loop_pre_header
                _
              $region88: #{spatial_att.1} parent=85 // loop_header
                %s1426 = sphi 0, %s1430
                %p1427 = scmp.ge.s32.totalorder %s1426, 1
                %s1431 = sphi %s1412, %s1412
                %s1432 = sphi %s1417, %s1417
              $region89: #{spatial_att.1} parent=85 // loop_header_branch
                %1429 = sbr.rel (%p1427) target = $region93
              $region90: #{spatial_att.1} parent=85 // loop_body
                %v1433 = vld [vmem:[%s1431] sm:$0xff]
                %1434 = vst [vmem:[%s1432] sm:$0xff] %v1433
                %v1435 = vld [vmem:[%s1431 + $0x8] sm:$0xff]
                %1436 = vst [vmem:[%s1432 + $0x10] sm:$0xff] %v1435
                %v1437 = vld [vmem:[%s1431 + $0x10] sm:$0xff]
                %1438 = vst [vmem:[%s1432 + $0x20] sm:$0xff] %v1437
                %v1439 = vld [vmem:[%s1431 + $0x18] sm:$0xff]
                %1440 = vst [vmem:[%s1432 + $0x30] sm:$0xff] %v1439
                %v1441 = vld [vmem:[%s1431 + $0x20] sm:$0xff]
                %1442 = vst [vmem:[%s1432 + $0x40] sm:$0xff] %v1441
                %v1443 = vld [vmem:[%s1431 + $0x28] sm:$0xff]
                %1444 = vst [vmem:[%s1432 + $0x50] sm:$0xff] %v1443
                %v1445 = vld [vmem:[%s1431 + $0x30] sm:$0xff]
                %1446 = vst [vmem:[%s1432 + $0x60] sm:$0xff] %v1445
                %v1447 = vld [vmem:[%s1431 + $0x38] sm:$0xff]
                %1448 = vst [vmem:[%s1432 + $0x70] sm:$0xff] %v1447
                %v1449 = vld [vmem:[%s1431 + $0x40] sm:$0xff]
                %1450 = vst [vmem:[%s1432 + $0x80] sm:$0xff] %v1449
                %v1451 = vld [vmem:[%s1431 + $0x48] sm:$0xff]
                %1452 = vst [vmem:[%s1432 + $0x90] sm:$0xff] %v1451
                %v1453 = vld [vmem:[%s1431 + $0x50] sm:$0xff]
                %1454 = vst [vmem:[%s1432 + $0xa0] sm:$0xff] %v1453
                %v1455 = vld [vmem:[%s1431 + $0x58] sm:$0xff]
                %1456 = vst [vmem:[%s1432 + $0xb0] sm:$0xff] %v1455
                %v1457 = vld [vmem:[%s1431 + $0x60] sm:$0xff]
                %1458 = vst [vmem:[%s1432 + $0xc0] sm:$0xff] %v1457
                %v1459 = vld [vmem:[%s1431 + $0x68] sm:$0xff]
                %1460 = vst [vmem:[%s1432 + $0xd0] sm:$0xff] %v1459
                %v1461 = vld [vmem:[%s1431 + $0x70] sm:$0xff]
                %1462 = vst [vmem:[%s1432 + $0xe0] sm:$0xff] %v1461
                %v1463 = vld [vmem:[%s1431 + $0x78] sm:$0xff]
                %1464 = vst [vmem:[%s1432 + $0xf0] sm:$0xff] %v1463
                %v1465 = vld [vmem:[%s1431 + $0x80] sm:$0xff]
                %1466 = vst [vmem:[%s1432 + $0x100] sm:$0xff] %v1465
                %v1467 = vld [vmem:[%s1431 + $0x88] sm:$0xff]
                %1468 = vst [vmem:[%s1432 + $0x110] sm:$0xff] %v1467
                %v1469 = vld [vmem:[%s1431 + $0x90] sm:$0xff]
                %1470 = vst [vmem:[%s1432 + $0x120] sm:$0xff] %v1469
                %v1471 = vld [vmem:[%s1431 + $0x98] sm:$0xff]
                %1472 = vst [vmem:[%s1432 + $0x130] sm:$0xff] %v1471
                %v1473 = vld [vmem:[%s1431 + $0xa0] sm:$0xff]
                %1474 = vst [vmem:[%s1432 + $0x140] sm:$0xff] %v1473
                %v1475 = vld [vmem:[%s1431 + $0xa8] sm:$0xff]
                %1476 = vst [vmem:[%s1432 + $0x150] sm:$0xff] %v1475
                %v1477 = vld [vmem:[%s1431 + $0xb0] sm:$0xff]
                %1478 = vst [vmem:[%s1432 + $0x160] sm:$0xff] %v1477
                %v1479 = vld [vmem:[%s1431 + $0xb8] sm:$0xff]
                %1480 = vst [vmem:[%s1432 + $0x170] sm:$0xff] %v1479
                %v1481 = vld [vmem:[%s1431 + $0xc0] sm:$0xff]
                %1482 = vst [vmem:[%s1432 + $0x180] sm:$0xff] %v1481
                %v1483 = vld [vmem:[%s1431 + $0xc8] sm:$0xff]
                %1484 = vst [vmem:[%s1432 + $0x190] sm:$0xff] %v1483
                %v1485 = vld [vmem:[%s1431 + $0xd0] sm:$0xff]
                %1486 = vst [vmem:[%s1432 + $0x1a0] sm:$0xff] %v1485
                %v1487 = vld [vmem:[%s1431 + $0xd8] sm:$0xff]
                %1488 = vst [vmem:[%s1432 + $0x1b0] sm:$0xff] %v1487
                %v1489 = vld [vmem:[%s1431 + $0xe0] sm:$0xff]
                %1490 = vst [vmem:[%s1432 + $0x1c0] sm:$0xff] %v1489
                %v1491 = vld [vmem:[%s1431 + $0xe8] sm:$0xff]
                %1492 = vst [vmem:[%s1432 + $0x1d0] sm:$0xff] %v1491
                %v1493 = vld [vmem:[%s1431 + $0xf0] sm:$0xff]
                %1494 = vst [vmem:[%s1432 + $0x1e0] sm:$0xff] %v1493
                %v1495 = vld [vmem:[%s1431 + $0xf8] sm:$0xff]
                %1496 = vst [vmem:[%s1432 + $0x1f0] sm:$0xff] %v1495
                %v1497 = vld [vmem:[%s1431 + $0x100] sm:$0xff]
                %1498 = vst [vmem:[%s1432 + $0x200] sm:$0xff] %v1497
                %v1499 = vld [vmem:[%s1431 + $0x108] sm:$0xff]
                %1500 = vst [vmem:[%s1432 + $0x210] sm:$0xff] %v1499
                %v1501 = vld [vmem:[%s1431 + $0x110] sm:$0xff]
                %1502 = vst [vmem:[%s1432 + $0x220] sm:$0xff] %v1501
                %v1503 = vld [vmem:[%s1431 + $0x118] sm:$0xff]
                %1504 = vst [vmem:[%s1432 + $0x230] sm:$0xff] %v1503
                %v1505 = vld [vmem:[%s1431 + $0x120] sm:$0xff]
                %1506 = vst [vmem:[%s1432 + $0x240] sm:$0xff] %v1505
                %v1507 = vld [vmem:[%s1431 + $0x128] sm:$0xff]
                %1508 = vst [vmem:[%s1432 + $0x250] sm:$0xff] %v1507
                %v1509 = vld [vmem:[%s1431 + $0x130] sm:$0xff]
                %1510 = vst [vmem:[%s1432 + $0x260] sm:$0xff] %v1509
                %v1511 = vld [vmem:[%s1431 + $0x138] sm:$0xff]
                %1512 = vst [vmem:[%s1432 + $0x270] sm:$0xff] %v1511
                %v1513 = vld [vmem:[%s1431 + $0x140] sm:$0xff]
                %1514 = vst [vmem:[%s1432 + $0x280] sm:$0xff] %v1513
                %v1515 = vld [vmem:[%s1431 + $0x148] sm:$0xff]
                %1516 = vst [vmem:[%s1432 + $0x290] sm:$0xff] %v1515
                %v1517 = vld [vmem:[%s1431 + $0x150] sm:$0xff]
                %1518 = vst [vmem:[%s1432 + $0x2a0] sm:$0xff] %v1517
                %v1519 = vld [vmem:[%s1431 + $0x158] sm:$0xff]
                %1520 = vst [vmem:[%s1432 + $0x2b0] sm:$0xff] %v1519
                %v1521 = vld [vmem:[%s1431 + $0x160] sm:$0xff]
                %1522 = vst [vmem:[%s1432 + $0x2c0] sm:$0xff] %v1521
                %v1523 = vld [vmem:[%s1431 + $0x168] sm:$0xff]
                %1524 = vst [vmem:[%s1432 + $0x2d0] sm:$0xff] %v1523
                %v1525 = vld [vmem:[%s1431 + $0x170] sm:$0xff]
                %1526 = vst [vmem:[%s1432 + $0x2e0] sm:$0xff] %v1525
                %v1527 = vld [vmem:[%s1431 + $0x178] sm:$0xff]
                %1528 = vst [vmem:[%s1432 + $0x2f0] sm:$0xff] %v1527
                %v1529 = vld [vmem:[%s1431 + $0x180] sm:$0xff]
                %1530 = vst [vmem:[%s1432 + $0x300] sm:$0xff] %v1529
                %v1531 = vld [vmem:[%s1431 + $0x188] sm:$0xff]
                %1532 = vst [vmem:[%s1432 + $0x310] sm:$0xff] %v1531
                %v1533 = vld [vmem:[%s1431 + $0x190] sm:$0xff]
                %1534 = vst [vmem:[%s1432 + $0x320] sm:$0xff] %v1533
                %v1535 = vld [vmem:[%s1431 + $0x198] sm:$0xff]
                %1536 = vst [vmem:[%s1432 + $0x330] sm:$0xff] %v1535
                %v1537 = vld [vmem:[%s1431 + $0x1a0] sm:$0xff]
                %1538 = vst [vmem:[%s1432 + $0x340] sm:$0xff] %v1537
                %v1539 = vld [vmem:[%s1431 + $0x1a8] sm:$0xff]
                %1540 = vst [vmem:[%s1432 + $0x350] sm:$0xff] %v1539
                %v1541 = vld [vmem:[%s1431 + $0x1b0] sm:$0xff]
                %1542 = vst [vmem:[%s1432 + $0x360] sm:$0xff] %v1541
                %v1543 = vld [vmem:[%s1431 + $0x1b8] sm:$0xff]
                %1544 = vst [vmem:[%s1432 + $0x370] sm:$0xff] %v1543
                %v1545 = vld [vmem:[%s1431 + $0x1c0] sm:$0xff]
                %1546 = vst [vmem:[%s1432 + $0x380] sm:$0xff] %v1545
                %v1547 = vld [vmem:[%s1431 + $0x1c8] sm:$0xff]
                %1548 = vst [vmem:[%s1432 + $0x390] sm:$0xff] %v1547
                %v1549 = vld [vmem:[%s1431 + $0x1d0] sm:$0xff]
                %1550 = vst [vmem:[%s1432 + $0x3a0] sm:$0xff] %v1549
                %v1551 = vld [vmem:[%s1431 + $0x1d8] sm:$0xff]
                %1552 = vst [vmem:[%s1432 + $0x3b0] sm:$0xff] %v1551
                %v1553 = vld [vmem:[%s1431 + $0x1e0] sm:$0xff]
                %1554 = vst [vmem:[%s1432 + $0x3c0] sm:$0xff] %v1553
                %v1555 = vld [vmem:[%s1431 + $0x1e8] sm:$0xff]
                %1556 = vst [vmem:[%s1432 + $0x3d0] sm:$0xff] %v1555
                %v1557 = vld [vmem:[%s1431 + $0x1f0] sm:$0xff]
                %1558 = vst [vmem:[%s1432 + $0x3e0] sm:$0xff] %v1557
                %v1559 = vld [vmem:[%s1431 + $0x1f8] sm:$0xff]
                %1560 = vst [vmem:[%s1432 + $0x3f0] sm:$0xff] %v1559
              $region91: #{spatial_att.1} parent=85 // loop_footer
                %s1430 = sadd.s32 1, %s1426
              $region92: #{spatial_att.1} parent=85 // loop_footer_branch
                %1425 = sbr.rel target = $region88
              $region93: #{spatial_att.1} parent=85 // loop_exit
                _
            $region86: #{spatial_att.1} parent=77 // pred_fallthru
              _
          $region78: #{spatial_att.1} parent=73 // pred_fallthru
            _
          %1701 = vnop
        $region74: #{spatial_att.1} parent=65 // pred_fallthru
          _
      $region66: #{spatial_att.1} parent=5 // pred_fallthru
        _
      %p1702 = scmp.le.s32.totalorder 2, %s9
      // Predicated region
      $region109: #{spatial_att.1} parent=5 // pred_check
        %p1703 = pneg %p1702
      $region110: #{spatial_att.1} parent=5 // pred_check_branch
        %1705 = sbr.rel (%p1703) target = $region112
      $region111: #{spatial_att.1} parent=5 // pred_region
        %s1706 = ssub.s32 %s9, 2
        // Predicated region
        $region113: #{spatial_att.1} parent=111 // pred_check
          %p1707 = pneg %p116
        $region114: #{spatial_att.1} parent=111 // pred_check_branch
          %1709 = sbr.rel (%p1707) target = $region116
        $region115: #{spatial_att.1} parent=111 // pred_region
          %s1710 = sand.u32 %s101, 1
          %s1711 = sand.u32 %s101, 1
          %s1712 = smul.addr %s1711, 512
          %s1713 = scalar_lea.vmem [#allocation3], %s1712
        $region116: #{spatial_att.1} parent=111 // pred_fallthru
          _
      $region112: #{spatial_att.1} parent=5 // pred_fallthru
        _
    $region6: #{spatial_att.1} parent=1 // loop_footer
      %s13 = sadd.s32 1, %s9
    $region7: #{spatial_att.1} parent=1 // loop_footer_branch
      %8 = sbr.rel target = $region3
    $region8: #{spatial_att.1} parent=1 // loop_exit
      _

</llo_original>
